<compile_context>
chip_gen: v6e
topology: v6e:2x2x1
jax: 0.10.0
libtpu: 0.0.40
codegen_flags: <defaults>
</compile_context>

<pallas_src>
import math

import jax
import jax.numpy as jnp
from jax import lax
from jax.experimental import pallas as pl
from jax.experimental.pallas import tpu as pltpu

# CRF hyper-parameters (fixed, deterministic).
THETA_ALPHA = 2.0   # spatial bandwidth of appearance kernel
THETA_BETA = 4.0    # color bandwidth of appearance kernel
THETA_GAMMA = 1.0   # spatial bandwidth of smoothness kernel
W_APP = 1.0
W_SMOOTH = 0.5
NUM_MF_ITERS = 5

K_DIAG = W_APP + W_SMOOTH   # self-message weight, subtracted as O(N*C) correction


def _neg_pdist(u_ref, v_ref):
    """Single MXU pass giving (-pairwise distance + ln w) via augmented feats.

    u = [2*f, -|f|^2 + ln w, -1, 0pad],  v = [f, 1, |f|^2, 0pad]
    => (u @ v.T)[i,j] = -(|f_i|^2 + |f_j|^2 - 2 f_i.f_j) + ln w = -d_ij + ln w
    """
    return lax.dot_general(
        u_ref[...], v_ref[...],
        dimension_numbers=(((1,), (1,)), ((), ())),
        preferred_element_type=jnp.float32)


def crf_wrapper_kernel(xT_ref, wT_ref, bT_ref, u_app_ref, v_app_ref,
                       u_sm_ref, v_sm_ref, compatT_ref, o_ref):
    # ---- self.model(x): dense per-point projection, transposed layout ----
    unary_t = jnp.dot(wT_ref[...], xT_ref[...],
                      preferred_element_type=jnp.float32) + bT_ref[...]  # [C, N]

    # ---- CRF pairwise kernel: K = w_app*exp(-d_app) + w_smooth*exp(-d_sm) ----
    # Per-term bf16 cast: no f32 [N,N] K kept resident across the MF loop.
    k_bf16 = (jnp.exp(_neg_pdist(u_app_ref, v_app_ref)).astype(jnp.bfloat16)
              + jnp.exp(_neg_pdist(u_sm_ref, v_sm_ref)).astype(jnp.bfloat16))

    compat_t = compatT_ref[...]   # [C, C] = compat.T

    # ---- self.filter(finput): mean-field iterations (statically unrolled) ----
    # Lane-dense [C, N] layout throughout; K is symmetric so
    #   msg.T = (compat.T @ Q.T) @ K.
    logits_t = unary_t
    for _ in range(NUM_MF_ITERS):
        m = jnp.max(logits_t, axis=0, keepdims=True)             # [1, N]
        e = jnp.exp(logits_t - m)                                 # [C, N]
        denom = jnp.sum(e, axis=0, keepdims=True)                 # [1, N]
        q_t = e * pl.reciprocal(denom, approx=True)               # softmax, EUP
        qc_t = jnp.dot(compat_t, q_t,
                       preferred_element_type=jnp.float32)        # [C, N]
        msg_t = jnp.dot(qc_t.astype(jnp.bfloat16), k_bf16,
                        preferred_element_type=jnp.float32)       # [C, N]
        # Diagonal (self-message) correction: K[i,i] = W_APP + W_SMOOTH.
        logits_t = unary_t - (msg_t - K_DIAG * qc_t)

    o_ref[...] = logits_t.astype(o_ref.dtype)   # lane-dense [C, N] store


def _vmem_limit_bytes():
    # Generation-aware: ~96 MiB on v5e/v6e (128 MiB physical), ~48 MiB on v7x
    # (64 MiB physical per TC). Leave ~25% headroom for compiler scratch.
    try:
        cap = int(pltpu.get_tpu_info().vmem_capacity_bytes)
    except Exception:
        cap = 64 * 1024 * 1024
    return min((cap * 3) // 4, 110 * 1024 * 1024)


@jax.jit
def wrapper_forward(x, coords, colors, w_model, b_model, compat):
    n, c_in = x.shape
    c_out = w_model.shape[1]

    # ---- glue (O(N*8) wrapper work): fold Gaussian scales + build augmented
    # pairwise features so the kernel never touches [N,N] with the VPU. ----
    inv_a = 1.0 / (math.sqrt(2.0) * THETA_ALPHA)
    inv_b = 1.0 / (math.sqrt(2.0) * THETA_BETA)
    inv_g = 1.0 / (math.sqrt(2.0) * THETA_GAMMA)
    ca = coords.astype(jnp.float32) * inv_a                      # [N, 3]
    fb = colors.astype(jnp.float32) * inv_b                      # [N, 3]
    cg = coords.astype(jnp.float32) * inv_g                      # [N, 3]  (γ-scaled)

    ones = jnp.ones((n, 1), jnp.float32)
    zeros3 = jnp.zeros((n, 3), jnp.float32)

    feat_app = jnp.concatenate([ca, fb], axis=1)                 # [N, 6]
    sq_app = jnp.sum(feat_app * feat_app, axis=1, keepdims=True)  # [N, 1]
    u_app = jnp.concatenate(
        [2.0 * feat_app, -sq_app + math.log(W_APP), -ones], axis=1)   # [N, 8]
    v_app = jnp.concatenate([feat_app, ones, sq_app], axis=1)          # [N, 8]

    sq_sm = jnp.sum(cg * cg, axis=1, keepdims=True)              # [N, 1]
    u_sm = jnp.concatenate(
        [2.0 * cg, -sq_sm + math.log(W_SMOOTH), -ones, zeros3], axis=1)  # [N, 8]
    v_sm = jnp.concatenate([cg, ones, sq_sm, zeros3], axis=1)             # [N, 8]

    # Transposed (lane-dense) model/compat operands.
    xT = jnp.transpose(x.astype(jnp.float32))                    # [C_in, N]
    wT = jnp.transpose(w_model.astype(jnp.float32))              # [C_out, C_in]
    bT = b_model.astype(jnp.float32).reshape(c_out, 1)           # [C_out, 1]
    compatT = jnp.transpose(compat.astype(jnp.float32))          # [C_out, C_out]

    flops = (2 * c_out * c_in * n
             + 2 * (2 * n * n * 8)
             + NUM_MF_ITERS * (2 * c_out * c_out * n + 2 * c_out * n * n))
    transcendentals = 2 * n * n + NUM_MF_ITERS * (c_out + 1) * n
    bytes_accessed = 4 * (c_in * n + c_out * c_in + c_out
                          + 4 * n * 8 + c_out * c_out + c_out * n)

    operands = (xT, wT, bT, u_app, v_app, u_sm, v_sm, compatT)
    in_specs = [pl.BlockSpec(op.shape, lambda i: (0, 0)) for op in operands]

    out_t = pl.pallas_call(
        crf_wrapper_kernel,
        out_shape=jax.ShapeDtypeStruct((c_out, n), jnp.float32),
        grid_spec=pl.GridSpec(
            grid=(1,),
            in_specs=in_specs,
            out_specs=pl.BlockSpec((c_out, n), lambda i: (0, 0)),
        ),
        compiler_params=pltpu.CompilerParams(
            dimension_semantics=("arbitrary",),
            vmem_limit_bytes=_vmem_limit_bytes()),
        cost_estimate=pl.CostEstimate(
            flops=int(flops),
            transcendentals=int(transcendentals),
            bytes_accessed=int(bytes_accessed)),
    )(*operands)

    return jnp.transpose(out_t)   # [N, C_out]


def reference_forward(x, coords, colors, w_model, b_model, compat):
    """Pure-JAX f32 reference (eval-mode semantics)."""
    unary = x @ w_model + b_model
    ca = coords / (math.sqrt(2.0) * THETA_ALPHA)
    fb = colors / (math.sqrt(2.0) * THETA_BETA)
    cg = coords / (math.sqrt(2.0) * THETA_GAMMA)
    feat = jnp.concatenate([ca, fb], axis=1)

    def pd(a):
        sq = jnp.sum(a * a, axis=-1)
        return sq[:, None] + sq[None, :] - 2.0 * (a @ a.T)

    k = W_APP * jnp.exp(-pd(feat)) + W_SMOOTH * jnp.exp(-pd(cg))
    k = k - K_DIAG * jnp.eye(x.shape[0], dtype=jnp.float32)   # zero self-message
    logits = unary
    for _ in range(NUM_MF_ITERS):
        q = jax.nn.softmax(logits, axis=-1)
        logits = unary - k @ (q @ compat)
    return logits


if __name__ == "__main__":
    N = 128          # number of sparse points
    C_IN = 32        # input feature channels
    C_OUT = 8        # output classes

    key = jax.random.PRNGKey(0)
    kx, kc, kf, kw, kb, kcm = jax.random.split(key, 6)

    # Inputs (what Wrapper.forward receives).
    x = jax.random.normal(kx, (N, C_IN), dtype=jnp.float32)
    coords = jax.random.uniform(kc, (N, 3), dtype=jnp.float32) * 16.0
    colors = jax.random.uniform(kf, (N, 3), dtype=jnp.float32)

    # Deterministic parameters (model projection + CRF compatibility matrix).
    w_model = jax.random.normal(kw, (C_IN, C_OUT), dtype=jnp.float32) * 0.1
    b_model = jax.random.normal(kb, (C_OUT,), dtype=jnp.float32) * 0.01
    compat = (jnp.eye(C_OUT, dtype=jnp.float32)
              + 0.05 * jax.random.normal(kcm, (C_OUT, C_OUT), dtype=jnp.float32))

    out = wrapper_forward(x, coords, colors, w_model, b_model, compat)
    jax.block_until_ready(out)
    assert out.shape == (N, C_OUT) and out.dtype == jnp.float32
    assert bool(jnp.all(jnp.isfinite(out)))

    # Correctness check vs f32 reference (tolerance covers bf16 K + approx recip).
    ref = reference_forward(x, coords, colors, w_model, b_model, compat)
    err = float(jnp.max(jnp.abs(out - ref)))
    assert err < 0.2, f"max abs diff vs reference too large: {err}"

    print("KERNEL_OK")
</pallas_src>

<mosaic_0001>
module attributes {stable_mosaic.version = 11 : i64} {
  func.func @crf_wrapper_kernel(%arg0: i32, %arg1: memref<32x128xf32, #tpu.memory_space<vmem>>, %arg2: memref<8x32xf32, #tpu.memory_space<vmem>>, %arg3: memref<8x1xf32, #tpu.memory_space<vmem>>, %arg4: memref<128x8xf32, #tpu.memory_space<vmem>>, %arg5: memref<128x8xf32, #tpu.memory_space<vmem>>, %arg6: memref<128x8xf32, #tpu.memory_space<vmem>>, %arg7: memref<128x8xf32, #tpu.memory_space<vmem>>, %arg8: memref<8x8xf32, #tpu.memory_space<vmem>>, %arg9: memref<8x128xf32, #tpu.memory_space<vmem>>) attributes {dimension_semantics = [#tpu.dimension_semantics<arbitrary>], iteration_bounds = array<i64: 1>, scalar_prefetch = 0 : i64, scratch_operands = 0 : i64, tpu.core_type = #tpu.core_type<tc>, window_params = [{pipeline_mode = #tpu.pipeline_mode<synchronous>, transform_indices = @transform_0, window_bounds = array<i64: 32, 128>}, {pipeline_mode = #tpu.pipeline_mode<synchronous>, transform_indices = @transform_1, window_bounds = array<i64: 8, 32>}, {pipeline_mode = #tpu.pipeline_mode<synchronous>, transform_indices = @transform_2, window_bounds = array<i64: 8, 1>}, {pipeline_mode = #tpu.pipeline_mode<synchronous>, transform_indices = @transform_3, window_bounds = array<i64: 128, 8>}, {pipeline_mode = #tpu.pipeline_mode<synchronous>, transform_indices = @transform_4, window_bounds = array<i64: 128, 8>}, {pipeline_mode = #tpu.pipeline_mode<synchronous>, transform_indices = @transform_5, window_bounds = array<i64: 128, 8>}, {pipeline_mode = #tpu.pipeline_mode<synchronous>, transform_indices = @transform_6, window_bounds = array<i64: 128, 8>}, {pipeline_mode = #tpu.pipeline_mode<synchronous>, transform_indices = @transform_7, window_bounds = array<i64: 8, 8>}, {pipeline_mode = #tpu.pipeline_mode<synchronous>, transform_indices = @transform_8, window_bounds = array<i64: 8, 128>}]} {
    %c0 = arith.constant 0 : index
    %c0_0 = arith.constant 0 : index
    %0 = vector.load %arg2[%c0, %c0_0] : memref<8x32xf32, #tpu.memory_space<vmem>>, vector<8x32xf32>
    %c0_1 = arith.constant 0 : index
    %c0_2 = arith.constant 0 : index
    %1 = vector.load %arg1[%c0_1, %c0_2] : memref<32x128xf32, #tpu.memory_space<vmem>>, vector<32x128xf32>
    %cst = arith.constant dense<0.000000e+00> : vector<8x128xf32>
    %2 = tpu.matmul %0, %1, %cst {dimension_numbers = #tpu.dot_dimension_numbers<[1], [0], [0], [1], [0, 0, 1, 1], [], []>} : vector<8x32xf32>, vector<32x128xf32>, vector<8x128xf32> -> vector<8x128xf32>
    %c0_3 = arith.constant 0 : index
    %c0_4 = arith.constant 0 : index
    %3 = vector.load %arg3[%c0_3, %c0_4] : memref<8x1xf32, #tpu.memory_space<vmem>>, vector<8x1xf32>
    %4 = vector.broadcast %3 : vector<8x1xf32> to vector<8x128xf32>
    %5 = arith.addf %2, %4 : vector<8x128xf32>
    %c0_5 = arith.constant 0 : index
    %c0_6 = arith.constant 0 : index
    %6 = vector.load %arg4[%c0_5, %c0_6] : memref<128x8xf32, #tpu.memory_space<vmem>>, vector<128x8xf32>
    %c0_7 = arith.constant 0 : index
    %c0_8 = arith.constant 0 : index
    %7 = vector.load %arg5[%c0_7, %c0_8] : memref<128x8xf32, #tpu.memory_space<vmem>>, vector<128x8xf32>
    %cst_9 = arith.constant dense<0.000000e+00> : vector<128x128xf32>
    %8 = tpu.matmul %6, %7, %cst_9 {dimension_numbers = #tpu.dot_dimension_numbers<[1], [1], [0], [0], [0, 0, 1, 0], [], []>} : vector<128x8xf32>, vector<128x8xf32>, vector<128x128xf32> -> vector<128x128xf32>
    %9 = math.exp %8 : vector<128x128xf32>
    %10 = arith.truncf %9 : vector<128x128xf32> to vector<128x128xbf16>
    %c0_10 = arith.constant 0 : index
    %c0_11 = arith.constant 0 : index
    %11 = vector.load %arg6[%c0_10, %c0_11] : memref<128x8xf32, #tpu.memory_space<vmem>>, vector<128x8xf32>
    %c0_12 = arith.constant 0 : index
    %c0_13 = arith.constant 0 : index
    %12 = vector.load %arg7[%c0_12, %c0_13] : memref<128x8xf32, #tpu.memory_space<vmem>>, vector<128x8xf32>
    %cst_14 = arith.constant dense<0.000000e+00> : vector<128x128xf32>
    %13 = tpu.matmul %11, %12, %cst_14 {dimension_numbers = #tpu.dot_dimension_numbers<[1], [1], [0], [0], [0, 0, 1, 0], [], []>} : vector<128x8xf32>, vector<128x8xf32>, vector<128x128xf32> -> vector<128x128xf32>
    %14 = math.exp %13 : vector<128x128xf32>
    %15 = arith.truncf %14 : vector<128x128xf32> to vector<128x128xbf16>
    %16 = arith.addf %10, %15 : vector<128x128xbf16>
    %c0_15 = arith.constant 0 : index
    %c0_16 = arith.constant 0 : index
    %17 = vector.load %arg8[%c0_15, %c0_16] : memref<8x8xf32, #tpu.memory_space<vmem>>, vector<8x8xf32>
    %cst_17 = arith.constant dense<0xFF800000> : vector<128xf32>
    %18 = vector.multi_reduction <maximumf>, %5, %cst_17 [0] : vector<8x128xf32> to vector<128xf32>
    %19 = vector.shape_cast %18 : vector<128xf32> to vector<1x128xf32>
    %20 = vector.broadcast %19 : vector<1x128xf32> to vector<8x128xf32>
    %21 = arith.subf %5, %20 : vector<8x128xf32>
    %22 = math.exp %21 : vector<8x128xf32>
    %cst_18 = arith.constant dense<0.000000e+00> : vector<128xf32>
    %23 = vector.multi_reduction <add>, %22, %cst_18 [0] : vector<8x128xf32> to vector<128xf32>
    %24 = vector.shape_cast %23 : vector<128xf32> to vector<1x128xf32>
    %25 = tpu.reciprocal %24 {approx = true} : vector<1x128xf32> -> vector<1x128xf32>
    %26 = vector.broadcast %25 : vector<1x128xf32> to vector<8x128xf32>
    %27 = arith.mulf %22, %26 : vector<8x128xf32>
    %cst_19 = arith.constant dense<0.000000e+00> : vector<8x128xf32>
    %28 = tpu.matmul %17, %27, %cst_19 {dimension_numbers = #tpu.dot_dimension_numbers<[1], [0], [0], [1], [0, 0, 1, 1], [], []>} : vector<8x8xf32>, vector<8x128xf32>, vector<8x128xf32> -> vector<8x128xf32>
    %29 = arith.truncf %28 : vector<8x128xf32> to vector<8x128xbf16>
    %cst_20 = arith.constant dense<0.000000e+00> : vector<8x128xf32>
    %30 = tpu.matmul %29, %16, %cst_20 {dimension_numbers = #tpu.dot_dimension_numbers<[1], [0], [0], [1], [0, 0, 1, 1], [], []>} : vector<8x128xbf16>, vector<128x128xbf16>, vector<8x128xf32> -> vector<8x128xf32>
    %cst_21 = arith.constant 1.500000e+00 : f32
    %31 = vector.broadcast %cst_21 : f32 to vector<8x128xf32>
    %32 = arith.mulf %31, %28 : vector<8x128xf32>
    %33 = arith.subf %30, %32 : vector<8x128xf32>
    %34 = arith.subf %5, %33 : vector<8x128xf32>
    %cst_22 = arith.constant dense<0xFF800000> : vector<128xf32>
    %35 = vector.multi_reduction <maximumf>, %34, %cst_22 [0] : vector<8x128xf32> to vector<128xf32>
    %36 = vector.shape_cast %35 : vector<128xf32> to vector<1x128xf32>
    %37 = vector.broadcast %36 : vector<1x128xf32> to vector<8x128xf32>
    %38 = arith.subf %34, %37 : vector<8x128xf32>
    %39 = math.exp %38 : vector<8x128xf32>
    %cst_23 = arith.constant dense<0.000000e+00> : vector<128xf32>
    %40 = vector.multi_reduction <add>, %39, %cst_23 [0] : vector<8x128xf32> to vector<128xf32>
    %41 = vector.shape_cast %40 : vector<128xf32> to vector<1x128xf32>
    %42 = tpu.reciprocal %41 {approx = true} : vector<1x128xf32> -> vector<1x128xf32>
    %43 = vector.broadcast %42 : vector<1x128xf32> to vector<8x128xf32>
    %44 = arith.mulf %39, %43 : vector<8x128xf32>
    %cst_24 = arith.constant dense<0.000000e+00> : vector<8x128xf32>
    %45 = tpu.matmul %17, %44, %cst_24 {dimension_numbers = #tpu.dot_dimension_numbers<[1], [0], [0], [1], [0, 0, 1, 1], [], []>} : vector<8x8xf32>, vector<8x128xf32>, vector<8x128xf32> -> vector<8x128xf32>
    %46 = arith.truncf %45 : vector<8x128xf32> to vector<8x128xbf16>
    %cst_25 = arith.constant dense<0.000000e+00> : vector<8x128xf32>
    %47 = tpu.matmul %46, %16, %cst_25 {dimension_numbers = #tpu.dot_dimension_numbers<[1], [0], [0], [1], [0, 0, 1, 1], [], []>} : vector<8x128xbf16>, vector<128x128xbf16>, vector<8x128xf32> -> vector<8x128xf32>
    %cst_26 = arith.constant 1.500000e+00 : f32
    %48 = vector.broadcast %cst_26 : f32 to vector<8x128xf32>
    %49 = arith.mulf %48, %45 : vector<8x128xf32>
    %50 = arith.subf %47, %49 : vector<8x128xf32>
    %51 = arith.subf %5, %50 : vector<8x128xf32>
    %cst_27 = arith.constant dense<0xFF800000> : vector<128xf32>
    %52 = vector.multi_reduction <maximumf>, %51, %cst_27 [0] : vector<8x128xf32> to vector<128xf32>
    %53 = vector.shape_cast %52 : vector<128xf32> to vector<1x128xf32>
    %54 = vector.broadcast %53 : vector<1x128xf32> to vector<8x128xf32>
    %55 = arith.subf %51, %54 : vector<8x128xf32>
    %56 = math.exp %55 : vector<8x128xf32>
    %cst_28 = arith.constant dense<0.000000e+00> : vector<128xf32>
    %57 = vector.multi_reduction <add>, %56, %cst_28 [0] : vector<8x128xf32> to vector<128xf32>
    %58 = vector.shape_cast %57 : vector<128xf32> to vector<1x128xf32>
    %59 = tpu.reciprocal %58 {approx = true} : vector<1x128xf32> -> vector<1x128xf32>
    %60 = vector.broadcast %59 : vector<1x128xf32> to vector<8x128xf32>
    %61 = arith.mulf %56, %60 : vector<8x128xf32>
    %cst_29 = arith.constant dense<0.000000e+00> : vector<8x128xf32>
    %62 = tpu.matmul %17, %61, %cst_29 {dimension_numbers = #tpu.dot_dimension_numbers<[1], [0], [0], [1], [0, 0, 1, 1], [], []>} : vector<8x8xf32>, vector<8x128xf32>, vector<8x128xf32> -> vector<8x128xf32>
    %63 = arith.truncf %62 : vector<8x128xf32> to vector<8x128xbf16>
    %cst_30 = arith.constant dense<0.000000e+00> : vector<8x128xf32>
    %64 = tpu.matmul %63, %16, %cst_30 {dimension_numbers = #tpu.dot_dimension_numbers<[1], [0], [0], [1], [0, 0, 1, 1], [], []>} : vector<8x128xbf16>, vector<128x128xbf16>, vector<8x128xf32> -> vector<8x128xf32>
    %cst_31 = arith.constant 1.500000e+00 : f32
    %65 = vector.broadcast %cst_31 : f32 to vector<8x128xf32>
    %66 = arith.mulf %65, %62 : vector<8x128xf32>
    %67 = arith.subf %64, %66 : vector<8x128xf32>
    %68 = arith.subf %5, %67 : vector<8x128xf32>
    %cst_32 = arith.constant dense<0xFF800000> : vector<128xf32>
    %69 = vector.multi_reduction <maximumf>, %68, %cst_32 [0] : vector<8x128xf32> to vector<128xf32>
    %70 = vector.shape_cast %69 : vector<128xf32> to vector<1x128xf32>
    %71 = vector.broadcast %70 : vector<1x128xf32> to vector<8x128xf32>
    %72 = arith.subf %68, %71 : vector<8x128xf32>
    %73 = math.exp %72 : vector<8x128xf32>
    %cst_33 = arith.constant dense<0.000000e+00> : vector<128xf32>
    %74 = vector.multi_reduction <add>, %73, %cst_33 [0] : vector<8x128xf32> to vector<128xf32>
    %75 = vector.shape_cast %74 : vector<128xf32> to vector<1x128xf32>
    %76 = tpu.reciprocal %75 {approx = true} : vector<1x128xf32> -> vector<1x128xf32>
    %77 = vector.broadcast %76 : vector<1x128xf32> to vector<8x128xf32>
    %78 = arith.mulf %73, %77 : vector<8x128xf32>
    %cst_34 = arith.constant dense<0.000000e+00> : vector<8x128xf32>
    %79 = tpu.matmul %17, %78, %cst_34 {dimension_numbers = #tpu.dot_dimension_numbers<[1], [0], [0], [1], [0, 0, 1, 1], [], []>} : vector<8x8xf32>, vector<8x128xf32>, vector<8x128xf32> -> vector<8x128xf32>
    %80 = arith.truncf %79 : vector<8x128xf32> to vector<8x128xbf16>
    %cst_35 = arith.constant dense<0.000000e+00> : vector<8x128xf32>
    %81 = tpu.matmul %80, %16, %cst_35 {dimension_numbers = #tpu.dot_dimension_numbers<[1], [0], [0], [1], [0, 0, 1, 1], [], []>} : vector<8x128xbf16>, vector<128x128xbf16>, vector<8x128xf32> -> vector<8x128xf32>
    %cst_36 = arith.constant 1.500000e+00 : f32
    %82 = vector.broadcast %cst_36 : f32 to vector<8x128xf32>
    %83 = arith.mulf %82, %79 : vector<8x128xf32>
    %84 = arith.subf %81, %83 : vector<8x128xf32>
    %85 = arith.subf %5, %84 : vector<8x128xf32>
    %cst_37 = arith.constant dense<0xFF800000> : vector<128xf32>
    %86 = vector.multi_reduction <maximumf>, %85, %cst_37 [0] : vector<8x128xf32> to vector<128xf32>
    %87 = vector.shape_cast %86 : vector<128xf32> to vector<1x128xf32>
    %88 = vector.broadcast %87 : vector<1x128xf32> to vector<8x128xf32>
    %89 = arith.subf %85, %88 : vector<8x128xf32>
    %90 = math.exp %89 : vector<8x128xf32>
    %cst_38 = arith.constant dense<0.000000e+00> : vector<128xf32>
    %91 = vector.multi_reduction <add>, %90, %cst_38 [0] : vector<8x128xf32> to vector<128xf32>
    %92 = vector.shape_cast %91 : vector<128xf32> to vector<1x128xf32>
    %93 = tpu.reciprocal %92 {approx = true} : vector<1x128xf32> -> vector<1x128xf32>
    %94 = vector.broadcast %93 : vector<1x128xf32> to vector<8x128xf32>
    %95 = arith.mulf %90, %94 : vector<8x128xf32>
    %cst_39 = arith.constant dense<0.000000e+00> : vector<8x128xf32>
    %96 = tpu.matmul %17, %95, %cst_39 {dimension_numbers = #tpu.dot_dimension_numbers<[1], [0], [0], [1], [0, 0, 1, 1], [], []>} : vector<8x8xf32>, vector<8x128xf32>, vector<8x128xf32> -> vector<8x128xf32>
    %97 = arith.truncf %96 : vector<8x128xf32> to vector<8x128xbf16>
    %cst_40 = arith.constant dense<0.000000e+00> : vector<8x128xf32>
    %98 = tpu.matmul %97, %16, %cst_40 {dimension_numbers = #tpu.dot_dimension_numbers<[1], [0], [0], [1], [0, 0, 1, 1], [], []>} : vector<8x128xbf16>, vector<128x128xbf16>, vector<8x128xf32> -> vector<8x128xf32>
    %cst_41 = arith.constant 1.500000e+00 : f32
    %99 = vector.broadcast %cst_41 : f32 to vector<8x128xf32>
    %100 = arith.mulf %99, %96 : vector<8x128xf32>
    %101 = arith.subf %98, %100 : vector<8x128xf32>
    %102 = arith.subf %5, %101 : vector<8x128xf32>
    %c0_42 = arith.constant 0 : index
    %c0_43 = arith.constant 0 : index
    %103 = vector.load %arg9[%c0_42, %c0_43] : memref<8x128xf32, #tpu.memory_space<vmem>>, vector<8x128xf32>
    tpu.vector_store %arg9[%c0_42, %c0_43], %102 {strides = array<i32>} : memref<8x128xf32, #tpu.memory_space<vmem>>, vector<8x128xf32>,
    return
  }
  func.func @transform_0(%arg0: i32) -> (i32, i32) {
    %c0_i32 = arith.constant 0 : i32
    %c0_i32_0 = arith.constant 0 : i32
    %c0_i32_1 = arith.constant 0 : i32
    return %c0_i32, %c0_i32_0 : i32, i32
  }
  func.func @transform_1(%arg0: i32) -> (i32, i32) {
    %c0_i32 = arith.constant 0 : i32
    %c0_i32_0 = arith.constant 0 : i32
    %c0_i32_1 = arith.constant 0 : i32
    return %c0_i32, %c0_i32_0 : i32, i32
  }
  func.func @transform_2(%arg0: i32) -> (i32, i32) {
    %c0_i32 = arith.constant 0 : i32
    %c0_i32_0 = arith.constant 0 : i32
    %c0_i32_1 = arith.constant 0 : i32
    return %c0_i32, %c0_i32_0 : i32, i32
  }
  func.func @transform_3(%arg0: i32) -> (i32, i32) {
    %c0_i32 = arith.constant 0 : i32
    %c0_i32_0 = arith.constant 0 : i32
    %c0_i32_1 = arith.constant 0 : i32
    return %c0_i32, %c0_i32_0 : i32, i32
  }
  func.func @transform_4(%arg0: i32) -> (i32, i32) {
    %c0_i32 = arith.constant 0 : i32
    %c0_i32_0 = arith.constant 0 : i32
    %c0_i32_1 = arith.constant 0 : i32
    return %c0_i32, %c0_i32_0 : i32, i32
  }
  func.func @transform_5(%arg0: i32) -> (i32, i32) {
    %c0_i32 = arith.constant 0 : i32
    %c0_i32_0 = arith.constant 0 : i32
    %c0_i32_1 = arith.constant 0 : i32
    return %c0_i32, %c0_i32_0 : i32, i32
  }
  func.func @transform_6(%arg0: i32) -> (i32, i32) {
    %c0_i32 = arith.constant 0 : i32
    %c0_i32_0 = arith.constant 0 : i32
    %c0_i32_1 = arith.constant 0 : i32
    return %c0_i32, %c0_i32_0 : i32, i32
  }
  func.func @transform_7(%arg0: i32) -> (i32, i32) {
    %c0_i32 = arith.constant 0 : i32
    %c0_i32_0 = arith.constant 0 : i32
    %c0_i32_1 = arith.constant 0 : i32
    return %c0_i32, %c0_i32_0 : i32, i32
  }
  func.func @transform_8(%arg0: i32) -> (i32, i32) {
    %c0_i32 = arith.constant 0 : i32
    %c0_i32_0 = arith.constant 0 : i32
    %c0_i32_1 = arith.constant 0 : i32
    return %c0_i32, %c0_i32_0 : i32, i32
  }
}

</mosaic_0001>

<llo_original>
// kernel: wrapper_forward.1
$region0: #{wrapper_forward.1}
  #allocation0 [shape = 'u32[]', space=smem, size = 0x4, offset = 0x4, fixed_abs, tag = 'smem constant byte address 0x4 - core index']
  #allocation1 [shape = 'u32[144,128]{1,0:T(1,128)}', space=vmem, size = 0x12000, scoped, tag = 'internal scratch']
  %s0 = inlined_call_operand.vmem [shape: f32[32,128], index: 0, kind: input, shape index: {}]
  %s1 = inlined_call_operand.vmem [shape: f32[8,32], index: 1, kind: input, shape index: {}]
  %s2 = inlined_call_operand.vmem [shape: f32[8,1], index: 2, kind: input, shape index: {}]
  %s3 = inlined_call_operand.vmem [shape: f32[128,8], index: 3, kind: input, shape index: {}]
  %s4 = inlined_call_operand.vmem [shape: f32[128,8], index: 4, kind: input, shape index: {}]
  %s5 = inlined_call_operand.vmem [shape: f32[128,8], index: 5, kind: input, shape index: {}]
  %s6 = inlined_call_operand.vmem [shape: f32[128,8], index: 6, kind: input, shape index: {}]
  %s7 = inlined_call_operand.vmem [shape: f32[8,8], index: 7, kind: input, shape index: {}]
  %s8 = inlined_call_operand.hbm [shape: f32[8,128], index: 8, kind: output, shape index: {}]
  %s9 = sld [smem:[#allocation0]]
  $region42: #{wrapper_forward.1} parent=0
    _
  %s11 = ssub.s32 1, %s9
  %s12 = scalar_select 0, %s11, %s9
  $region1: #{wrapper_forward.1} parent=0
    #allocation2 [shape = 'u8[4096]{0}', space=vmem, size = 0x1000, scoped, tag = 'output window, operand 0, single buffered']
    #allocation3 [shape = 's32[1]{0}', space=sflag, size = 0x4, scoped, tag = 'scoped memory for wrapper_forward.1']
    %13 = vsyncpa [#allocation3], 0
    // Predicated region
    $region2: #{wrapper_forward.1} parent=1 // pred_check
      _
    $region3: #{wrapper_forward.1} parent=1 // pred_check_branch
      %15 = sbr.rel (0) target = $region5
    $region4: #{wrapper_forward.1} parent=1 // pred_region
      _
    $region5: #{wrapper_forward.1} parent=1 // pred_fallthru
      _
    // Predicated region
    $region6: #{wrapper_forward.1} parent=1 // pred_check
      _
    $region7: #{wrapper_forward.1} parent=1 // pred_check_branch
      %17 = sbr.rel (0) target = $region9
    $region8: #{wrapper_forward.1} parent=1 // pred_region
      _
    $region9: #{wrapper_forward.1} parent=1 // pred_fallthru
      _
    // Predicated region
    $region10: #{wrapper_forward.1} parent=1 // pred_check
      _
    $region11: #{wrapper_forward.1} parent=1 // pred_check_branch
      %19 = sbr.rel (0) target = $region13
    $region12: #{wrapper_forward.1} parent=1 // pred_region
      _
    $region13: #{wrapper_forward.1} parent=1 // pred_fallthru
      _
    // Predicated region
    $region14: #{wrapper_forward.1} parent=1 // pred_check
      _
    $region15: #{wrapper_forward.1} parent=1 // pred_check_branch
      %21 = sbr.rel (0) target = $region17
    $region16: #{wrapper_forward.1} parent=1 // pred_region
      _
    $region17: #{wrapper_forward.1} parent=1 // pred_fallthru
      _
    // Predicated region
    $region18: #{wrapper_forward.1} parent=1 // pred_check
      _
    $region19: #{wrapper_forward.1} parent=1 // pred_check_branch
      %23 = sbr.rel (0) target = $region21
    $region20: #{wrapper_forward.1} parent=1 // pred_region
      _
    $region21: #{wrapper_forward.1} parent=1 // pred_fallthru
      _
    // Predicated region
    $region22: #{wrapper_forward.1} parent=1 // pred_check
      _
    $region23: #{wrapper_forward.1} parent=1 // pred_check_branch
      %25 = sbr.rel (0) target = $region25
    $region24: #{wrapper_forward.1} parent=1 // pred_region
      _
    $region25: #{wrapper_forward.1} parent=1 // pred_fallthru
      _
    // Predicated region
    $region26: #{wrapper_forward.1} parent=1 // pred_check
      _
    $region27: #{wrapper_forward.1} parent=1 // pred_check_branch
      %27 = sbr.rel (0) target = $region29
    $region28: #{wrapper_forward.1} parent=1 // pred_region
      _
    $region29: #{wrapper_forward.1} parent=1 // pred_fallthru
      _
    // Predicated region
    $region30: #{wrapper_forward.1} parent=1 // pred_check
      _
    $region31: #{wrapper_forward.1} parent=1 // pred_check_branch
      %29 = sbr.rel (0) target = $region33
    $region32: #{wrapper_forward.1} parent=1 // pred_region
      _
    $region33: #{wrapper_forward.1} parent=1 // pred_fallthru
      _
    %v31 = vld [vmem:[%s1] sm:$0xff]
    %v32 = vld [vmem:[%s0] sm:$0xff]
    %v33 = vld [vmem:[%s0 + $0x8] sm:$0xff]
    %v34 = vld [vmem:[%s0 + $0x10] sm:$0xff]
    %v35 = vld [vmem:[%s0 + $0x18] sm:$0xff]
    %v36 = vld [vmem:[%s2] sm:$0xff]
    %38 = vset.pattern.permute.xlu0 0
    %39 = vperm.xlu0 %38, %v36
    %v40 = vpop.permute.xlu0 %39
    %vm42 = vcmask 261120
    %v44 = vsel %vm42, %v31, 0
    %46 = vmatprep.subr.mxu0 0.0
    %47 = vmatpush1.msra.mxu0 0.0
    %48 = vmatprep.subr.mxu0 0.0
    %49 = vmatpush1.msra.mxu0 0.0
    %50 = vmatprep.subr.mxu0 0.0
    %51 = vmatpush1.msra.mxu0 0.0
    %52 = vmatprep.subr.mxu0 0.0
    %53 = vmatpush1.msra.mxu0 0.0
    %54 = vmatprep.subr.mxu0 0.0
    %55 = vmatpush1.msra.mxu0 0.0
    %56 = vmatprep.subr.mxu0 0.0
    %57 = vmatpush1.msra.mxu0 0.0
    %58 = vmatprep.subr.mxu0 0.0
    %59 = vmatpush1.msra.mxu0 0.0
    %60 = vmatprep.subr.mxu0 0.0
    %61 = vmatpush1.msra.mxu0 0.0
    %62 = vmatprep.subr.mxu0 0.0
    %63 = vmatpush1.msra.mxu0 0.0
    %64 = vmatprep.subr.mxu0 0.0
    %65 = vmatpush1.msra.mxu0 0.0
    %66 = vmatprep.subr.mxu0 0.0
    %67 = vmatpush1.msra.mxu0 0.0
    %68 = vmatprep.subr.mxu0 0.0
    %69 = vmatpush1.msra.mxu0 0.0
    %70 = vmatprep.subr.mxu0 0.0
    %71 = vmatpush1.msra.mxu0 %v35
    %72 = vmatprep.subr.mxu0 0.0
    %73 = vmatpush1.msra.mxu0 %v34
    %74 = vmatprep.subr.mxu0 0.0
    %75 = vmatpush1.msra.mxu0 %v33
    %76 = vmatprep.subr.mxu0 0.0
    %77 = vmatpush1.msra.mxu0 %v32
    %78 = vmatprep.subr.mxu0 0.0
    %79 = vmatpush2.msra.mxu0 0.0
    %80 = vmatprep.subr.mxu0 0.0
    %81 = vmatpush2.msra.mxu0 0.0
    %82 = vmatprep.subr.mxu0 0.0
    %83 = vmatpush2.msra.mxu0 0.0
    %84 = vmatprep.subr.mxu0 0.0
    %85 = vmatpush2.msra.mxu0 0.0
    %86 = vmatprep.subr.mxu0 0.0
    %87 = vmatpush2.msra.mxu0 0.0
    %88 = vmatprep.subr.mxu0 0.0
    %89 = vmatpush2.msra.mxu0 0.0
    %90 = vmatprep.subr.mxu0 0.0
    %91 = vmatpush2.msra.mxu0 0.0
    %92 = vmatprep.subr.mxu0 0.0
    %93 = vmatpush2.msra.mxu0 0.0
    %94 = vmatprep.subr.mxu0 0.0
    %95 = vmatpush2.msra.mxu0 0.0
    %96 = vmatprep.subr.mxu0 0.0
    %97 = vmatpush2.msra.mxu0 0.0
    %98 = vmatprep.subr.mxu0 0.0
    %99 = vmatpush2.msra.mxu0 0.0
    %100 = vmatprep.subr.mxu0 0.0
    %101 = vmatpush2.msra.mxu0 0.0
    %102 = vmatprep.subr.mxu0 0.0
    %103 = vmatpush2.msra.mxu0 0.0
    %104 = vmatprep.subr.mxu0 0.0
    %105 = vmatpush2.msra.mxu0 0.0
    %106 = vmatprep.subr.mxu0 0.0
    %107 = vmatpush2.msra.mxu0 0.0
    %108 = vmatprep.subr.mxu0 0.0
    %109 = vmatpush2.msra.mxu0 0.0
    %110 = vmatprep.mubr.f32.mxu0 0.0
    %111 = vmatmul.mubr.f32.gmra.mxu0 %v44
    %v112 = vpop.f32.mrf.mxu0
    %v113 = vadd.f32 %v40, %v112
    %v114 = vpop.f32.mrf.mxu0
    %115 = vdwg.mxu0
    %v116 = vld [vmem:[%s3] sm:$0xff]
    %v117 = vld [vmem:[%s3 + $0x8] sm:$0xff]
    %v118 = vld [vmem:[%s3 + $0x10] sm:$0xff]
    %v119 = vld [vmem:[%s3 + $0x18] sm:$0xff]
    %v120 = vld [vmem:[%s3 + $0x20] sm:$0xff]
    %v121 = vld [vmem:[%s3 + $0x28] sm:$0xff]
    %v122 = vld [vmem:[%s3 + $0x30] sm:$0xff]
    %v123 = vld [vmem:[%s3 + $0x38] sm:$0xff]
    %v124 = vld [vmem:[%s3 + $0x40] sm:$0xff]
    %v125 = vld [vmem:[%s3 + $0x48] sm:$0xff]
    %v126 = vld [vmem:[%s3 + $0x50] sm:$0xff]
    %v127 = vld [vmem:[%s3 + $0x58] sm:$0xff]
    %v128 = vld [vmem:[%s3 + $0x60] sm:$0xff]
    %v129 = vld [vmem:[%s3 + $0x68] sm:$0xff]
    %v130 = vld [vmem:[%s3 + $0x70] sm:$0xff]
    %v131 = vld [vmem:[%s3 + $0x78] sm:$0xff]
    %v132 = vld [vmem:[%s4] sm:$0xff]
    %v133 = vld [vmem:[%s4 + $0x8] sm:$0xff]
    %v134 = vld [vmem:[%s4 + $0x10] sm:$0xff]
    %v135 = vld [vmem:[%s4 + $0x18] sm:$0xff]
    %v136 = vld [vmem:[%s4 + $0x20] sm:$0xff]
    %v137 = vld [vmem:[%s4 + $0x28] sm:$0xff]
    %v138 = vld [vmem:[%s4 + $0x30] sm:$0xff]
    %v139 = vld [vmem:[%s4 + $0x38] sm:$0xff]
    %v140 = vld [vmem:[%s4 + $0x40] sm:$0xff]
    %v141 = vld [vmem:[%s4 + $0x48] sm:$0xff]
    %v142 = vld [vmem:[%s4 + $0x50] sm:$0xff]
    %v143 = vld [vmem:[%s4 + $0x58] sm:$0xff]
    %v144 = vld [vmem:[%s4 + $0x60] sm:$0xff]
    %v145 = vld [vmem:[%s4 + $0x68] sm:$0xff]
    %v146 = vld [vmem:[%s4 + $0x70] sm:$0xff]
    %v147 = vld [vmem:[%s4 + $0x78] sm:$0xff]
    %vm148 = vcmask 64512
    %v150 = vsel %vm148, %v116, 0
    %v153 = vsel %vm148, %v117, 0
    %v156 = vsel %vm148, %v118, 0
    %v159 = vsel %vm148, %v119, 0
    %v162 = vsel %vm148, %v120, 0
    %v165 = vsel %vm148, %v121, 0
    %v168 = vsel %vm148, %v122, 0
    %v171 = vsel %vm148, %v123, 0
    %v174 = vsel %vm148, %v124, 0
    %v177 = vsel %vm148, %v125, 0
    %v180 = vsel %vm148, %v126, 0
    %v183 = vsel %vm148, %v127, 0
    %v186 = vsel %vm148, %v128, 0
    %v189 = vsel %vm148, %v129, 0
    %v192 = vsel %vm148, %v130, 0
    %v195 = vsel %vm148, %v131, 0
    %v198 = vsel %vm148, %v132, 0
    %v201 = vsel %vm148, %v133, 0
    %v204 = vsel %vm148, %v134, 0
    %v207 = vsel %vm148, %v135, 0
    %v210 = vsel %vm148, %v136, 0
    %v213 = vsel %vm148, %v137, 0
    %v216 = vsel %vm148, %v138, 0
    %v219 = vsel %vm148, %v139, 0
    %v222 = vsel %vm148, %v140, 0
    %v225 = vsel %vm148, %v141, 0
    %v228 = vsel %vm148, %v142, 0
    %v231 = vsel %vm148, %v143, 0
    %v234 = vsel %vm148, %v144, 0
    %v237 = vsel %vm148, %v145, 0
    %v240 = vsel %vm148, %v146, 0
    %v243 = vsel %vm148, %v147, 0
    %245 = vmatprep.subr.mxu0 0.0
    %246 = vmatpush1.xpose.msra.mxu0 %v243
    %247 = vmatprep.subr.mxu0 0.0
    %248 = vmatpush1.xpose.msra.mxu0 %v240
    %249 = vmatprep.subr.mxu0 0.0
    %250 = vmatpush1.xpose.msra.mxu0 %v237
    %251 = vmatprep.subr.mxu0 0.0
    %252 = vmatpush1.xpose.msra.mxu0 %v234
    %253 = vmatprep.subr.mxu0 0.0
    %254 = vmatpush1.xpose.msra.mxu0 %v231
    %255 = vmatprep.subr.mxu0 0.0
    %256 = vmatpush1.xpose.msra.mxu0 %v228
    %257 = vmatprep.subr.mxu0 0.0
    %258 = vmatpush1.xpose.msra.mxu0 %v225
    %259 = vmatprep.subr.mxu0 0.0
    %260 = vmatpush1.xpose.msra.mxu0 %v222
    %261 = vmatprep.subr.mxu0 0.0
    %262 = vmatpush1.xpose.msra.mxu0 %v219
    %263 = vmatprep.subr.mxu0 0.0
    %264 = vmatpush1.xpose.msra.mxu0 %v216
    %265 = vmatprep.subr.mxu0 0.0
    %266 = vmatpush1.xpose.msra.mxu0 %v213
    %267 = vmatprep.subr.mxu0 0.0
    %268 = vmatpush1.xpose.msra.mxu0 %v210
    %269 = vmatprep.subr.mxu0 0.0
    %270 = vmatpush1.xpose.msra.mxu0 %v207
    %271 = vmatprep.subr.mxu0 0.0
    %272 = vmatpush1.xpose.msra.mxu0 %v204
    %273 = vmatprep.subr.mxu0 0.0
    %274 = vmatpush1.xpose.msra.mxu0 %v201
    %275 = vmatprep.subr.mxu0 0.0
    %276 = vmatpush1.xpose.msra.mxu0 %v198
    %277 = vmatprep.subr.mxu0 0.0
    %278 = vmatpush2.xpose.msra.mxu0 0.0
    %279 = vmatprep.subr.mxu0 0.0
    %280 = vmatpush2.xpose.msra.mxu0 0.0
    %281 = vmatprep.subr.mxu0 0.0
    %282 = vmatpush2.xpose.msra.mxu0 0.0
    %283 = vmatprep.subr.mxu0 0.0
    %284 = vmatpush2.xpose.msra.mxu0 0.0
    %285 = vmatprep.subr.mxu0 0.0
    %286 = vmatpush2.xpose.msra.mxu0 0.0
    %287 = vmatprep.subr.mxu0 0.0
    %288 = vmatpush2.xpose.msra.mxu0 0.0
    %289 = vmatprep.subr.mxu0 0.0
    %290 = vmatpush2.xpose.msra.mxu0 0.0
    %291 = vmatprep.subr.mxu0 0.0
    %292 = vmatpush2.xpose.msra.mxu0 0.0
    %293 = vmatprep.subr.mxu0 0.0
    %294 = vmatpush2.xpose.msra.mxu0 0.0
    %295 = vmatprep.subr.mxu0 0.0
    %296 = vmatpush2.xpose.msra.mxu0 0.0
    %297 = vmatprep.subr.mxu0 0.0
    %298 = vmatpush2.xpose.msra.mxu0 0.0
    %299 = vmatprep.subr.mxu0 0.0
    %300 = vmatpush2.xpose.msra.mxu0 0.0
    %301 = vmatprep.subr.mxu0 0.0
    %302 = vmatpush2.xpose.msra.mxu0 0.0
    %303 = vmatprep.subr.mxu0 0.0
    %304 = vmatpush2.xpose.msra.mxu0 0.0
    %305 = vmatprep.subr.mxu0 0.0
    %306 = vmatpush2.xpose.msra.mxu0 0.0
    %307 = vmatprep.subr.mxu0 0.0
    %308 = vmatpush2.xpose.msra.mxu0 0.0
    %309 = vmatprep.mubr.f32.mxu0 0.0
    %310 = vmatmul.mubr.f32.gmra.mxu0 %v150
    %v311 = vpop.f32.mrf.mxu0
    %v312 = vadd.f32 0.0, %v311
    %v313 = vpop.f32.mrf.mxu0
    %314 = vmatprep.mubr.f32.mxu0 0.0
    %315 = vmatmul.mubr.f32.gmra.mxu0 %v153
    %v316 = vpop.f32.mrf.mxu0
    %v317 = vadd.f32 0.0, %v316
    %v318 = vpop.f32.mrf.mxu0
    %319 = vmatprep.mubr.f32.mxu0 0.0
    %320 = vmatmul.mubr.f32.gmra.mxu0 %v156
    %v321 = vpop.f32.mrf.mxu0
    %v322 = vadd.f32 0.0, %v321
    %v323 = vpop.f32.mrf.mxu0
    %324 = vmatprep.mubr.f32.mxu0 0.0
    %325 = vmatmul.mubr.f32.gmra.mxu0 %v159
    %v326 = vpop.f32.mrf.mxu0
    %v327 = vadd.f32 0.0, %v326
    %v328 = vpop.f32.mrf.mxu0
    %329 = vmatprep.mubr.f32.mxu0 0.0
    %330 = vmatmul.mubr.f32.gmra.mxu0 %v162
    %v331 = vpop.f32.mrf.mxu0
    %v332 = vadd.f32 0.0, %v331
    %v333 = vpop.f32.mrf.mxu0
    %334 = vmatprep.mubr.f32.mxu0 0.0
    %335 = vmatmul.mubr.f32.gmra.mxu0 %v165
    %v336 = vpop.f32.mrf.mxu0
    %v337 = vadd.f32 0.0, %v336
    %v338 = vpop.f32.mrf.mxu0
    %339 = vmatprep.mubr.f32.mxu0 0.0
    %340 = vmatmul.mubr.f32.gmra.mxu0 %v168
    %v341 = vpop.f32.mrf.mxu0
    %v342 = vadd.f32 0.0, %v341
    %v343 = vpop.f32.mrf.mxu0
    %344 = vmatprep.mubr.f32.mxu0 0.0
    %345 = vmatmul.mubr.f32.gmra.mxu0 %v171
    %v346 = vpop.f32.mrf.mxu0
    %v347 = vadd.f32 0.0, %v346
    %v348 = vpop.f32.mrf.mxu0
    %349 = vmatprep.mubr.f32.mxu0 0.0
    %350 = vmatmul.mubr.f32.gmra.mxu0 %v174
    %v351 = vpop.f32.mrf.mxu0
    %v352 = vadd.f32 0.0, %v351
    %v353 = vpop.f32.mrf.mxu0
    %354 = vmatprep.mubr.f32.mxu0 0.0
    %355 = vmatmul.mubr.f32.gmra.mxu0 %v177
    %v356 = vpop.f32.mrf.mxu0
    %v357 = vadd.f32 0.0, %v356
    %v358 = vpop.f32.mrf.mxu0
    %359 = vmatprep.mubr.f32.mxu0 0.0
    %360 = vmatmul.mubr.f32.gmra.mxu0 %v180
    %v361 = vpop.f32.mrf.mxu0
    %v362 = vadd.f32 0.0, %v361
    %v363 = vpop.f32.mrf.mxu0
    %364 = vmatprep.mubr.f32.mxu0 0.0
    %365 = vmatmul.mubr.f32.gmra.mxu0 %v183
    %v366 = vpop.f32.mrf.mxu0
    %v367 = vadd.f32 0.0, %v366
    %v368 = vpop.f32.mrf.mxu0
    %369 = vmatprep.mubr.f32.mxu0 0.0
    %370 = vmatmul.mubr.f32.gmra.mxu0 %v186
    %v371 = vpop.f32.mrf.mxu0
    %v372 = vadd.f32 0.0, %v371
    %v373 = vpop.f32.mrf.mxu0
    %374 = vmatprep.mubr.f32.mxu0 0.0
    %375 = vmatmul.mubr.f32.gmra.mxu0 %v189
    %v376 = vpop.f32.mrf.mxu0
    %v377 = vadd.f32 0.0, %v376
    %v378 = vpop.f32.mrf.mxu0
    %379 = vmatprep.mubr.f32.mxu0 0.0
    %380 = vmatmul.mubr.f32.gmra.mxu0 %v192
    %v381 = vpop.f32.mrf.mxu0
    %v382 = vadd.f32 0.0, %v381
    %v383 = vpop.f32.mrf.mxu0
    %384 = vmatprep.mubr.f32.mxu0 0.0
    %385 = vmatmul.mubr.f32.gmra.mxu0 %v195
    %v386 = vpop.f32.mrf.mxu0
    %v387 = vadd.f32 0.0, %v386
    %v388 = vpop.f32.mrf.mxu0
    %389 = vdwg.mxu0
    %v390 = vmul.f32 %v312, 1.442695
    %v391 = vpow.pop %v390
    %v392 = vmul.f32 %v317, 1.442695
    %v393 = vpow.pop %v392
    %v394 = vmul.f32 %v322, 1.442695
    %v395 = vpow.pop %v394
    %v396 = vmul.f32 %v327, 1.442695
    %v397 = vpow.pop %v396
    %v398 = vmul.f32 %v332, 1.442695
    %v399 = vpow.pop %v398
    %v400 = vmul.f32 %v337, 1.442695
    %v401 = vpow.pop %v400
    %v402 = vmul.f32 %v342, 1.442695
    %v403 = vpow.pop %v402
    %v404 = vmul.f32 %v347, 1.442695
    %v405 = vpow.pop %v404
    %v406 = vmul.f32 %v352, 1.442695
    %v407 = vpow.pop %v406
    %v408 = vmul.f32 %v357, 1.442695
    %v409 = vpow.pop %v408
    %v410 = vmul.f32 %v362, 1.442695
    %v411 = vpow.pop %v410
    %v412 = vmul.f32 %v367, 1.442695
    %v413 = vpow.pop %v412
    %v414 = vmul.f32 %v372, 1.442695
    %v415 = vpow.pop %v414
    %v416 = vmul.f32 %v377, 1.442695
    %v417 = vpow.pop %v416
    %v418 = vmul.f32 %v382, 1.442695
    %v419 = vpow.pop %v418
    %v420 = vmul.f32 %v387, 1.442695
    %v421 = vpow.pop %v420
    %v422 = vpack.c.bf16 %v393, %v391
    %v423 = vpack.c.bf16 %v397, %v395
    %v424 = vpack.c.bf16 %v401, %v399
    %v425 = vpack.c.bf16 %v405, %v403
    %v426 = vpack.c.bf16 %v409, %v407
    %v427 = vpack.c.bf16 %v413, %v411
    %v428 = vpack.c.bf16 %v417, %v415
    %v429 = vpack.c.bf16 %v421, %v419
    %v430 = vld [vmem:[%s5] sm:$0xff]
    %v431 = vld [vmem:[%s5 + $0x8] sm:$0xff]
    %v432 = vld [vmem:[%s5 + $0x10] sm:$0xff]
    %v433 = vld [vmem:[%s5 + $0x18] sm:$0xff]
    %v434 = vld [vmem:[%s5 + $0x20] sm:$0xff]
    %v435 = vld [vmem:[%s5 + $0x28] sm:$0xff]
    %v436 = vld [vmem:[%s5 + $0x30] sm:$0xff]
    %v437 = vld [vmem:[%s5 + $0x38] sm:$0xff]
    %v438 = vld [vmem:[%s5 + $0x40] sm:$0xff]
    %v439 = vld [vmem:[%s5 + $0x48] sm:$0xff]
    %v440 = vld [vmem:[%s5 + $0x50] sm:$0xff]
    %v441 = vld [vmem:[%s5 + $0x58] sm:$0xff]
    %v442 = vld [vmem:[%s5 + $0x60] sm:$0xff]
    %v443 = vld [vmem:[%s5 + $0x68] sm:$0xff]
    %v444 = vld [vmem:[%s5 + $0x70] sm:$0xff]
    %v445 = vld [vmem:[%s5 + $0x78] sm:$0xff]
    %v446 = vld [vmem:[%s6] sm:$0xff]
    %v447 = vld [vmem:[%s6 + $0x8] sm:$0xff]
    %v448 = vld [vmem:[%s6 + $0x10] sm:$0xff]
    %v449 = vld [vmem:[%s6 + $0x18] sm:$0xff]
    %v450 = vld [vmem:[%s6 + $0x20] sm:$0xff]
    %v451 = vld [vmem:[%s6 + $0x28] sm:$0xff]
    %v452 = vld [vmem:[%s6 + $0x30] sm:$0xff]
    %v453 = vld [vmem:[%s6 + $0x38] sm:$0xff]
    %v454 = vld [vmem:[%s6 + $0x40] sm:$0xff]
    %v455 = vld [vmem:[%s6 + $0x48] sm:$0xff]
    %v456 = vld [vmem:[%s6 + $0x50] sm:$0xff]
    %v457 = vld [vmem:[%s6 + $0x58] sm:$0xff]
    %v458 = vld [vmem:[%s6 + $0x60] sm:$0xff]
    %v459 = vld [vmem:[%s6 + $0x68] sm:$0xff]
    %v460 = vld [vmem:[%s6 + $0x70] sm:$0xff]
    %v461 = vld [vmem:[%s6 + $0x78] sm:$0xff]
    %v463 = vsel %vm148, %v430, 0
    %v466 = vsel %vm148, %v431, 0
    %v469 = vsel %vm148, %v432, 0
    %v472 = vsel %vm148, %v433, 0
    %v475 = vsel %vm148, %v434, 0
    %v478 = vsel %vm148, %v435, 0
    %v481 = vsel %vm148, %v436, 0
    %v484 = vsel %vm148, %v437, 0
    %v487 = vsel %vm148, %v438, 0
    %v490 = vsel %vm148, %v439, 0
    %v493 = vsel %vm148, %v440, 0
    %v496 = vsel %vm148, %v441, 0
    %v499 = vsel %vm148, %v442, 0
    %v502 = vsel %vm148, %v443, 0
    %v505 = vsel %vm148, %v444, 0
    %v508 = vsel %vm148, %v445, 0
    %v511 = vsel %vm148, %v446, 0
    %v514 = vsel %vm148, %v447, 0
    %v517 = vsel %vm148, %v448, 0
    %v520 = vsel %vm148, %v449, 0
    %v523 = vsel %vm148, %v450, 0
    %v526 = vsel %vm148, %v451, 0
    %v529 = vsel %vm148, %v452, 0
    %v532 = vsel %vm148, %v453, 0
    %v535 = vsel %vm148, %v454, 0
    %v538 = vsel %vm148, %v455, 0
    %v541 = vsel %vm148, %v456, 0
    %v544 = vsel %vm148, %v457, 0
    %v547 = vsel %vm148, %v458, 0
    %v550 = vsel %vm148, %v459, 0
    %v553 = vsel %vm148, %v460, 0
    %v556 = vsel %vm148, %v461, 0
    %558 = vmatprep.subr.mxu0 0.0
    %559 = vmatpush1.xpose.msra.mxu0 %v556
    %560 = vmatprep.subr.mxu0 0.0
    %561 = vmatpush1.xpose.msra.mxu0 %v553
    %562 = vmatprep.subr.mxu0 0.0
    %563 = vmatpush1.xpose.msra.mxu0 %v550
    %564 = vmatprep.subr.mxu0 0.0
    %565 = vmatpush1.xpose.msra.mxu0 %v547
    %566 = vmatprep.subr.mxu0 0.0
    %567 = vmatpush1.xpose.msra.mxu0 %v544
    %568 = vmatprep.subr.mxu0 0.0
    %569 = vmatpush1.xpose.msra.mxu0 %v541
    %570 = vmatprep.subr.mxu0 0.0
    %571 = vmatpush1.xpose.msra.mxu0 %v538
    %572 = vmatprep.subr.mxu0 0.0
    %573 = vmatpush1.xpose.msra.mxu0 %v535
    %574 = vmatprep.subr.mxu0 0.0
    %575 = vmatpush1.xpose.msra.mxu0 %v532
    %576 = vmatprep.subr.mxu0 0.0
    %577 = vmatpush1.xpose.msra.mxu0 %v529
    %578 = vmatprep.subr.mxu0 0.0
    %579 = vmatpush1.xpose.msra.mxu0 %v526
    %580 = vmatprep.subr.mxu0 0.0
    %581 = vmatpush1.xpose.msra.mxu0 %v523
    %582 = vmatprep.subr.mxu0 0.0
    %583 = vmatpush1.xpose.msra.mxu0 %v520
    %584 = vmatprep.subr.mxu0 0.0
    %585 = vmatpush1.xpose.msra.mxu0 %v517
    %586 = vmatprep.subr.mxu0 0.0
    %587 = vmatpush1.xpose.msra.mxu0 %v514
    %588 = vmatprep.subr.mxu0 0.0
    %589 = vmatpush1.xpose.msra.mxu0 %v511
    %590 = vmatprep.subr.mxu0 0.0
    %591 = vmatpush2.xpose.msra.mxu0 0.0
    %592 = vmatprep.subr.mxu0 0.0
    %593 = vmatpush2.xpose.msra.mxu0 0.0
    %594 = vmatprep.subr.mxu0 0.0
    %595 = vmatpush2.xpose.msra.mxu0 0.0
    %596 = vmatprep.subr.mxu0 0.0
    %597 = vmatpush2.xpose.msra.mxu0 0.0
    %598 = vmatprep.subr.mxu0 0.0
    %599 = vmatpush2.xpose.msra.mxu0 0.0
    %600 = vmatprep.subr.mxu0 0.0
    %601 = vmatpush2.xpose.msra.mxu0 0.0
    %602 = vmatprep.subr.mxu0 0.0
    %603 = vmatpush2.xpose.msra.mxu0 0.0
    %604 = vmatprep.subr.mxu0 0.0
    %605 = vmatpush2.xpose.msra.mxu0 0.0
    %606 = vmatprep.subr.mxu0 0.0
    %607 = vmatpush2.xpose.msra.mxu0 0.0
    %608 = vmatprep.subr.mxu0 0.0
    %609 = vmatpush2.xpose.msra.mxu0 0.0
    %610 = vmatprep.subr.mxu0 0.0
    %611 = vmatpush2.xpose.msra.mxu0 0.0
    %612 = vmatprep.subr.mxu0 0.0
    %613 = vmatpush2.xpose.msra.mxu0 0.0
    %614 = vmatprep.subr.mxu0 0.0
    %615 = vmatpush2.xpose.msra.mxu0 0.0
    %616 = vmatprep.subr.mxu0 0.0
    %617 = vmatpush2.xpose.msra.mxu0 0.0
    %618 = vmatprep.subr.mxu0 0.0
    %619 = vmatpush2.xpose.msra.mxu0 0.0
    %620 = vmatprep.subr.mxu0 0.0
    %621 = vmatpush2.xpose.msra.mxu0 0.0
    %622 = vmatprep.mubr.f32.mxu0 0.0
    %623 = vmatmul.mubr.f32.gmra.mxu0 %v463
    %v624 = vpop.f32.mrf.mxu0
    %v625 = vadd.f32 0.0, %v624
    %v626 = vpop.f32.mrf.mxu0
    %627 = vmatprep.mubr.f32.mxu0 0.0
    %628 = vmatmul.mubr.f32.gmra.mxu0 %v466
    %v629 = vpop.f32.mrf.mxu0
    %v630 = vadd.f32 0.0, %v629
    %v631 = vpop.f32.mrf.mxu0
    %632 = vmatprep.mubr.f32.mxu0 0.0
    %633 = vmatmul.mubr.f32.gmra.mxu0 %v469
    %v634 = vpop.f32.mrf.mxu0
    %v635 = vadd.f32 0.0, %v634
    %v636 = vpop.f32.mrf.mxu0
    %637 = vmatprep.mubr.f32.mxu0 0.0
    %638 = vmatmul.mubr.f32.gmra.mxu0 %v472
    %v639 = vpop.f32.mrf.mxu0
    %v640 = vadd.f32 0.0, %v639
    %v641 = vpop.f32.mrf.mxu0
    %642 = vmatprep.mubr.f32.mxu0 0.0
    %643 = vmatmul.mubr.f32.gmra.mxu0 %v475
    %v644 = vpop.f32.mrf.mxu0
    %v645 = vadd.f32 0.0, %v644
    %v646 = vpop.f32.mrf.mxu0
    %647 = vmatprep.mubr.f32.mxu0 0.0
    %648 = vmatmul.mubr.f32.gmra.mxu0 %v478
    %v649 = vpop.f32.mrf.mxu0
    %v650 = vadd.f32 0.0, %v649
    %v651 = vpop.f32.mrf.mxu0
    %652 = vmatprep.mubr.f32.mxu0 0.0
    %653 = vmatmul.mubr.f32.gmra.mxu0 %v481
    %v654 = vpop.f32.mrf.mxu0
    %v655 = vadd.f32 0.0, %v654
    %v656 = vpop.f32.mrf.mxu0
    %657 = vmatprep.mubr.f32.mxu0 0.0
    %658 = vmatmul.mubr.f32.gmra.mxu0 %v484
    %v659 = vpop.f32.mrf.mxu0
    %v660 = vadd.f32 0.0, %v659
    %v661 = vpop.f32.mrf.mxu0
    %662 = vmatprep.mubr.f32.mxu0 0.0
    %663 = vmatmul.mubr.f32.gmra.mxu0 %v487
    %v664 = vpop.f32.mrf.mxu0
    %v665 = vadd.f32 0.0, %v664
    %v666 = vpop.f32.mrf.mxu0
    %667 = vmatprep.mubr.f32.mxu0 0.0
    %668 = vmatmul.mubr.f32.gmra.mxu0 %v490
    %v669 = vpop.f32.mrf.mxu0
    %v670 = vadd.f32 0.0, %v669
    %v671 = vpop.f32.mrf.mxu0
    %672 = vmatprep.mubr.f32.mxu0 0.0
    %673 = vmatmul.mubr.f32.gmra.mxu0 %v493
    %v674 = vpop.f32.mrf.mxu0
    %v675 = vadd.f32 0.0, %v674
    %v676 = vpop.f32.mrf.mxu0
    %677 = vmatprep.mubr.f32.mxu0 0.0
    %678 = vmatmul.mubr.f32.gmra.mxu0 %v496
    %v679 = vpop.f32.mrf.mxu0
    %v680 = vadd.f32 0.0, %v679
    %v681 = vpop.f32.mrf.mxu0
    %682 = vmatprep.mubr.f32.mxu0 0.0
    %683 = vmatmul.mubr.f32.gmra.mxu0 %v499
    %v684 = vpop.f32.mrf.mxu0
    %v685 = vadd.f32 0.0, %v684
    %v686 = vpop.f32.mrf.mxu0
    %687 = vmatprep.mubr.f32.mxu0 0.0
    %688 = vmatmul.mubr.f32.gmra.mxu0 %v502
    %v689 = vpop.f32.mrf.mxu0
    %v690 = vadd.f32 0.0, %v689
    %v691 = vpop.f32.mrf.mxu0
    %692 = vmatprep.mubr.f32.mxu0 0.0
    %693 = vmatmul.mubr.f32.gmra.mxu0 %v505
    %v694 = vpop.f32.mrf.mxu0
    %v695 = vadd.f32 0.0, %v694
    %v696 = vpop.f32.mrf.mxu0
    %697 = vmatprep.mubr.f32.mxu0 0.0
    %698 = vmatmul.mubr.f32.gmra.mxu0 %v508
    %v699 = vpop.f32.mrf.mxu0
    %v700 = vadd.f32 0.0, %v699
    %v701 = vpop.f32.mrf.mxu0
    %702 = vdwg.mxu0
    %v703 = vmul.f32 %v625, 1.442695
    %v704 = vpow.pop %v703
    %v705 = vmul.f32 %v630, 1.442695
    %v706 = vpow.pop %v705
    %v707 = vmul.f32 %v635, 1.442695
    %v708 = vpow.pop %v707
    %v709 = vmul.f32 %v640, 1.442695
    %v710 = vpow.pop %v709
    %v711 = vmul.f32 %v645, 1.442695
    %v712 = vpow.pop %v711
    %v713 = vmul.f32 %v650, 1.442695
    %v714 = vpow.pop %v713
    %v715 = vmul.f32 %v655, 1.442695
    %v716 = vpow.pop %v715
    %v717 = vmul.f32 %v660, 1.442695
    %v718 = vpow.pop %v717
    %v719 = vmul.f32 %v665, 1.442695
    %v720 = vpow.pop %v719
    %v721 = vmul.f32 %v670, 1.442695
    %v722 = vpow.pop %v721
    %v723 = vmul.f32 %v675, 1.442695
    %v724 = vpow.pop %v723
    %v725 = vmul.f32 %v680, 1.442695
    %v726 = vpow.pop %v725
    %v727 = vmul.f32 %v685, 1.442695
    %v728 = vpow.pop %v727
    %v729 = vmul.f32 %v690, 1.442695
    %v730 = vpow.pop %v729
    %v731 = vmul.f32 %v695, 1.442695
    %v732 = vpow.pop %v731
    %v733 = vmul.f32 %v700, 1.442695
    %v734 = vpow.pop %v733
    %v735 = vpack.c.bf16 %v706, %v704
    %v736 = vpack.c.bf16 %v710, %v708
    %v737 = vpack.c.bf16 %v714, %v712
    %v738 = vpack.c.bf16 %v718, %v716
    %v739 = vpack.c.bf16 %v722, %v720
    %v740 = vpack.c.bf16 %v726, %v724
    %v741 = vpack.c.bf16 %v730, %v728
    %v742 = vpack.c.bf16 %v734, %v732
    %v743 = vadd.bf16 %v422, %v735
    %v744 = vadd.bf16 %v423, %v736
    %v745 = vadd.bf16 %v424, %v737
    %v746 = vadd.bf16 %v425, %v738
    %v747 = vadd.bf16 %v426, %v739
    %v748 = vadd.bf16 %v427, %v740
    %v749 = vadd.bf16 %v428, %v741
    %v750 = vadd.bf16 %v429, %v742
    %v751 = vld [vmem:[%s7] sm:$0xff]
    %v752 = vrot.slane %v113, 4
    %v753 = vmax.f32 %v113, %v752
    %v754 = vrot.slane %v753, 2
    %v755 = vmax.f32 %v753, %v754
    %v756 = vrot.slane %v755, 1
    %v757 = vmax.f32 %v755, %v756
    %v758 = vsub.f32 %v113, %v757
    %v759 = vmul.f32 %v758, 1.442695
    %v760 = vpow.pop %v759
    %v761 = vrot.slane %v760, 4
    %v762 = vadd.f32 %v760, %v761
    %v763 = vrot.slane %v762, 2
    %v764 = vadd.f32 %v762, %v763
    %v765 = vrot.slane %v764, 1
    %v766 = vadd.f32 %v764, %v765
    %v767 = vrcp.pop %v766
    %v768 = vmul.f32 %v760, %v767
    %v770 = vsel %vm148, %v751, 0
    %772 = vmatprep.subr.mxu0 0.0
    %773 = vmatpush1.msra.mxu0 0.0
    %774 = vmatprep.subr.mxu0 0.0
    %775 = vmatpush1.msra.mxu0 0.0
    %776 = vmatprep.subr.mxu0 0.0
    %777 = vmatpush1.msra.mxu0 0.0
    %778 = vmatprep.subr.mxu0 0.0
    %779 = vmatpush1.msra.mxu0 0.0
    %780 = vmatprep.subr.mxu0 0.0
    %781 = vmatpush1.msra.mxu0 0.0
    %782 = vmatprep.subr.mxu0 0.0
    %783 = vmatpush1.msra.mxu0 0.0
    %784 = vmatprep.subr.mxu0 0.0
    %785 = vmatpush1.msra.mxu0 0.0
    %786 = vmatprep.subr.mxu0 0.0
    %787 = vmatpush1.msra.mxu0 0.0
    %788 = vmatprep.subr.mxu0 0.0
    %789 = vmatpush1.msra.mxu0 0.0
    %790 = vmatprep.subr.mxu0 0.0
    %791 = vmatpush1.msra.mxu0 0.0
    %792 = vmatprep.subr.mxu0 0.0
    %793 = vmatpush1.msra.mxu0 0.0
    %794 = vmatprep.subr.mxu0 0.0
    %795 = vmatpush1.msra.mxu0 0.0
    %796 = vmatprep.subr.mxu0 0.0
    %797 = vmatpush1.msra.mxu0 0.0
    %798 = vmatprep.subr.mxu0 0.0
    %799 = vmatpush1.msra.mxu0 0.0
    %800 = vmatprep.subr.mxu0 0.0
    %801 = vmatpush1.msra.mxu0 0.0
    %802 = vmatprep.subr.mxu0 0.0
    %803 = vmatpush1.msra.mxu0 %v768
    %804 = vmatprep.subr.mxu0 0.0
    %805 = vmatpush2.msra.mxu0 0.0
    %806 = vmatprep.subr.mxu0 0.0
    %807 = vmatpush2.msra.mxu0 0.0
    %808 = vmatprep.subr.mxu0 0.0
    %809 = vmatpush2.msra.mxu0 0.0
    %810 = vmatprep.subr.mxu0 0.0
    %811 = vmatpush2.msra.mxu0 0.0
    %812 = vmatprep.subr.mxu0 0.0
    %813 = vmatpush2.msra.mxu0 0.0
    %814 = vmatprep.subr.mxu0 0.0
    %815 = vmatpush2.msra.mxu0 0.0
    %816 = vmatprep.subr.mxu0 0.0
    %817 = vmatpush2.msra.mxu0 0.0
    %818 = vmatprep.subr.mxu0 0.0
    %819 = vmatpush2.msra.mxu0 0.0
    %820 = vmatprep.subr.mxu0 0.0
    %821 = vmatpush2.msra.mxu0 0.0
    %822 = vmatprep.subr.mxu0 0.0
    %823 = vmatpush2.msra.mxu0 0.0
    %824 = vmatprep.subr.mxu0 0.0
    %825 = vmatpush2.msra.mxu0 0.0
    %826 = vmatprep.subr.mxu0 0.0
    %827 = vmatpush2.msra.mxu0 0.0
    %828 = vmatprep.subr.mxu0 0.0
    %829 = vmatpush2.msra.mxu0 0.0
    %830 = vmatprep.subr.mxu0 0.0
    %831 = vmatpush2.msra.mxu0 0.0
    %832 = vmatprep.subr.mxu0 0.0
    %833 = vmatpush2.msra.mxu0 0.0
    %834 = vmatprep.subr.mxu0 0.0
    %835 = vmatpush2.msra.mxu0 0.0
    %836 = vmatprep.mubr.f32.mxu0 0.0
    %837 = vmatmul.mubr.f32.gmra.mxu0 %v770
    %v838 = vpop.f32.mrf.mxu0
    %v839 = vadd.f32 0.0, %v838
    %v840 = vpop.f32.mrf.mxu0
    %841 = vdwg.mxu0
    %v842 = vpack.c.bf16 %v839, %v839
    %843 = vmatprep.subr.bf16.mxu0 0
    %844 = vmatpush1.bf16.msra.mxu0 %v750
    %845 = vmatprep.subr.bf16.mxu0 0
    %846 = vmatpush1.bf16.msra.mxu0 %v749
    %847 = vmatprep.subr.bf16.mxu0 0
    %848 = vmatpush1.bf16.msra.mxu0 %v748
    %849 = vmatprep.subr.bf16.mxu0 0
    %850 = vmatpush1.bf16.msra.mxu0 %v747
    %851 = vmatprep.subr.bf16.mxu0 0
    %852 = vmatpush1.bf16.msra.mxu0 %v746
    %853 = vmatprep.subr.bf16.mxu0 0
    %854 = vmatpush1.bf16.msra.mxu0 %v745
    %855 = vmatprep.subr.bf16.mxu0 0
    %856 = vmatpush1.bf16.msra.mxu0 %v744
    %857 = vmatprep.subr.bf16.mxu0 0
    %858 = vmatpush1.bf16.msra.mxu0 %v743
    %859 = vmatprep.subr.bf16.mxu0 0
    %860 = vmatpush2.bf16.msra.mxu0 0
    %861 = vmatprep.subr.bf16.mxu0 0
    %862 = vmatpush2.bf16.msra.mxu0 0
    %863 = vmatprep.subr.bf16.mxu0 0
    %864 = vmatpush2.bf16.msra.mxu0 0
    %865 = vmatprep.subr.bf16.mxu0 0
    %866 = vmatpush2.bf16.msra.mxu0 0
    %867 = vmatprep.subr.bf16.mxu0 0
    %868 = vmatpush2.bf16.msra.mxu0 0
    %869 = vmatprep.subr.bf16.mxu0 0
    %870 = vmatpush2.bf16.msra.mxu0 0
    %871 = vmatprep.subr.bf16.mxu0 0
    %872 = vmatpush2.bf16.msra.mxu0 0
    %873 = vmatprep.subr.bf16.mxu0 0
    %874 = vmatpush2.bf16.msra.mxu0 0
    %875 = vmatprep.mubr.bf16.mxu0 0
    %876 = vmatmul.mubr.bf16.gmra.mxu0 %v842
    %v877 = vpop.f32.mrf.mxu0
    %v878 = vadd.f32 0.0, %v877
    %v879 = vpop.f32.mrf.mxu0
    %v880 = vpop.f32.mrf.mxu0
    %v881 = vpop.f32.mrf.mxu0
    %882 = vdwg.mxu0
    %v883 = vmul.f32 %v839, 1.5
    %v884 = vsub.f32 %v878, %v883
    %v885 = vsub.f32 %v113, %v884
    %v886 = vrot.slane %v885, 4
    %v887 = vmax.f32 %v885, %v886
    %v888 = vrot.slane %v887, 2
    %v889 = vmax.f32 %v887, %v888
    %v890 = vrot.slane %v889, 1
    %v891 = vmax.f32 %v889, %v890
    %v892 = vsub.f32 %v885, %v891
    %v893 = vmul.f32 %v892, 1.442695
    %v894 = vpow.pop %v893
    %v895 = vrot.slane %v894, 4
    %v896 = vadd.f32 %v894, %v895
    %v897 = vrot.slane %v896, 2
    %v898 = vadd.f32 %v896, %v897
    %v899 = vrot.slane %v898, 1
    %v900 = vadd.f32 %v898, %v899
    %v901 = vrcp.pop %v900
    %v902 = vmul.f32 %v894, %v901
    %903 = vmatprep.subr.mxu0 0.0
    %904 = vmatpush1.msra.mxu0 0.0
    %905 = vmatprep.subr.mxu0 0.0
    %906 = vmatpush1.msra.mxu0 0.0
    %907 = vmatprep.subr.mxu0 0.0
    %908 = vmatpush1.msra.mxu0 0.0
    %909 = vmatprep.subr.mxu0 0.0
    %910 = vmatpush1.msra.mxu0 0.0
    %911 = vmatprep.subr.mxu0 0.0
    %912 = vmatpush1.msra.mxu0 0.0
    %913 = vmatprep.subr.mxu0 0.0
    %914 = vmatpush1.msra.mxu0 0.0
    %915 = vmatprep.subr.mxu0 0.0
    %916 = vmatpush1.msra.mxu0 0.0
    %917 = vmatprep.subr.mxu0 0.0
    %918 = vmatpush1.msra.mxu0 0.0
    %919 = vmatprep.subr.mxu0 0.0
    %920 = vmatpush1.msra.mxu0 0.0
    %921 = vmatprep.subr.mxu0 0.0
    %922 = vmatpush1.msra.mxu0 0.0
    %923 = vmatprep.subr.mxu0 0.0
    %924 = vmatpush1.msra.mxu0 0.0
    %925 = vmatprep.subr.mxu0 0.0
    %926 = vmatpush1.msra.mxu0 0.0
    %927 = vmatprep.subr.mxu0 0.0
    %928 = vmatpush1.msra.mxu0 0.0
    %929 = vmatprep.subr.mxu0 0.0
    %930 = vmatpush1.msra.mxu0 0.0
    %931 = vmatprep.subr.mxu0 0.0
    %932 = vmatpush1.msra.mxu0 0.0
    %933 = vmatprep.subr.mxu0 0.0
    %934 = vmatpush1.msra.mxu0 %v902
    %935 = vmatprep.subr.mxu0 0.0
    %936 = vmatpush2.msra.mxu0 0.0
    %937 = vmatprep.subr.mxu0 0.0
    %938 = vmatpush2.msra.mxu0 0.0
    %939 = vmatprep.subr.mxu0 0.0
    %940 = vmatpush2.msra.mxu0 0.0
    %941 = vmatprep.subr.mxu0 0.0
    %942 = vmatpush2.msra.mxu0 0.0
    %943 = vmatprep.subr.mxu0 0.0
    %944 = vmatpush2.msra.mxu0 0.0
    %945 = vmatprep.subr.mxu0 0.0
    %946 = vmatpush2.msra.mxu0 0.0
    %947 = vmatprep.subr.mxu0 0.0
    %948 = vmatpush2.msra.mxu0 0.0
    %949 = vmatprep.subr.mxu0 0.0
    %950 = vmatpush2.msra.mxu0 0.0
    %951 = vmatprep.subr.mxu0 0.0
    %952 = vmatpush2.msra.mxu0 0.0
    %953 = vmatprep.subr.mxu0 0.0
    %954 = vmatpush2.msra.mxu0 0.0
    %955 = vmatprep.subr.mxu0 0.0
    %956 = vmatpush2.msra.mxu0 0.0
    %957 = vmatprep.subr.mxu0 0.0
    %958 = vmatpush2.msra.mxu0 0.0
    %959 = vmatprep.subr.mxu0 0.0
    %960 = vmatpush2.msra.mxu0 0.0
    %961 = vmatprep.subr.mxu0 0.0
    %962 = vmatpush2.msra.mxu0 0.0
    %963 = vmatprep.subr.mxu0 0.0
    %964 = vmatpush2.msra.mxu0 0.0
    %965 = vmatprep.subr.mxu0 0.0
    %966 = vmatpush2.msra.mxu0 0.0
    %967 = vmatprep.mubr.f32.mxu0 0.0
    %968 = vmatmul.mubr.f32.gmra.mxu0 %v770
    %v969 = vpop.f32.mrf.mxu0
    %v970 = vadd.f32 0.0, %v969
    %v971 = vpop.f32.mrf.mxu0
    %972 = vdwg.mxu0
    %v973 = vpack.c.bf16 %v970, %v970
    %974 = vmatprep.subr.bf16.mxu0 0
    %975 = vmatpush1.bf16.msra.mxu0 %v750
    %976 = vmatprep.subr.bf16.mxu0 0
    %977 = vmatpush1.bf16.msra.mxu0 %v749
    %978 = vmatprep.subr.bf16.mxu0 0
    %979 = vmatpush1.bf16.msra.mxu0 %v748
    %980 = vmatprep.subr.bf16.mxu0 0
    %981 = vmatpush1.bf16.msra.mxu0 %v747
    %982 = vmatprep.subr.bf16.mxu0 0
    %983 = vmatpush1.bf16.msra.mxu0 %v746
    %984 = vmatprep.subr.bf16.mxu0 0
    %985 = vmatpush1.bf16.msra.mxu0 %v745
    %986 = vmatprep.subr.bf16.mxu0 0
    %987 = vmatpush1.bf16.msra.mxu0 %v744
    %988 = vmatprep.subr.bf16.mxu0 0
    %989 = vmatpush1.bf16.msra.mxu0 %v743
    %990 = vmatprep.subr.bf16.mxu0 0
    %991 = vmatpush2.bf16.msra.mxu0 0
    %992 = vmatprep.subr.bf16.mxu0 0
    %993 = vmatpush2.bf16.msra.mxu0 0
    %994 = vmatprep.subr.bf16.mxu0 0
    %995 = vmatpush2.bf16.msra.mxu0 0
    %996 = vmatprep.subr.bf16.mxu0 0
    %997 = vmatpush2.bf16.msra.mxu0 0
    %998 = vmatprep.subr.bf16.mxu0 0
    %999 = vmatpush2.bf16.msra.mxu0 0
    %1000 = vmatprep.subr.bf16.mxu0 0
    %1001 = vmatpush2.bf16.msra.mxu0 0
    %1002 = vmatprep.subr.bf16.mxu0 0
    %1003 = vmatpush2.bf16.msra.mxu0 0
    %1004 = vmatprep.subr.bf16.mxu0 0
    %1005 = vmatpush2.bf16.msra.mxu0 0
    %1006 = vmatprep.mubr.bf16.mxu0 0
    %1007 = vmatmul.mubr.bf16.gmra.mxu0 %v973
    %v1008 = vpop.f32.mrf.mxu0
    %v1009 = vadd.f32 0.0, %v1008
    %v1010 = vpop.f32.mrf.mxu0
    %v1011 = vpop.f32.mrf.mxu0
    %v1012 = vpop.f32.mrf.mxu0
    %1013 = vdwg.mxu0
    %v1014 = vmul.f32 %v970, 1.5
    %v1015 = vsub.f32 %v1009, %v1014
    %v1016 = vsub.f32 %v113, %v1015
    %v1017 = vrot.slane %v1016, 4
    %v1018 = vmax.f32 %v1016, %v1017
    %v1019 = vrot.slane %v1018, 2
    %v1020 = vmax.f32 %v1018, %v1019
    %v1021 = vrot.slane %v1020, 1
    %v1022 = vmax.f32 %v1020, %v1021
    %v1023 = vsub.f32 %v1016, %v1022
    %v1024 = vmul.f32 %v1023, 1.442695
    %v1025 = vpow.pop %v1024
    %v1026 = vrot.slane %v1025, 4
    %v1027 = vadd.f32 %v1025, %v1026
    %v1028 = vrot.slane %v1027, 2
    %v1029 = vadd.f32 %v1027, %v1028
    %v1030 = vrot.slane %v1029, 1
    %v1031 = vadd.f32 %v1029, %v1030
    %v1032 = vrcp.pop %v1031
    %v1033 = vmul.f32 %v1025, %v1032
    %1034 = vmatprep.subr.mxu0 0.0
    %1035 = vmatpush1.msra.mxu0 0.0
    %1036 = vmatprep.subr.mxu0 0.0
    %1037 = vmatpush1.msra.mxu0 0.0
    %1038 = vmatprep.subr.mxu0 0.0
    %1039 = vmatpush1.msra.mxu0 0.0
    %1040 = vmatprep.subr.mxu0 0.0
    %1041 = vmatpush1.msra.mxu0 0.0
    %1042 = vmatprep.subr.mxu0 0.0
    %1043 = vmatpush1.msra.mxu0 0.0
    %1044 = vmatprep.subr.mxu0 0.0
    %1045 = vmatpush1.msra.mxu0 0.0
    %1046 = vmatprep.subr.mxu0 0.0
    %1047 = vmatpush1.msra.mxu0 0.0
    %1048 = vmatprep.subr.mxu0 0.0
    %1049 = vmatpush1.msra.mxu0 0.0
    %1050 = vmatprep.subr.mxu0 0.0
    %1051 = vmatpush1.msra.mxu0 0.0
    %1052 = vmatprep.subr.mxu0 0.0
    %1053 = vmatpush1.msra.mxu0 0.0
    %1054 = vmatprep.subr.mxu0 0.0
    %1055 = vmatpush1.msra.mxu0 0.0
    %1056 = vmatprep.subr.mxu0 0.0
    %1057 = vmatpush1.msra.mxu0 0.0
    %1058 = vmatprep.subr.mxu0 0.0
    %1059 = vmatpush1.msra.mxu0 0.0
    %1060 = vmatprep.subr.mxu0 0.0
    %1061 = vmatpush1.msra.mxu0 0.0
    %1062 = vmatprep.subr.mxu0 0.0
    %1063 = vmatpush1.msra.mxu0 0.0
    %1064 = vmatprep.subr.mxu0 0.0
    %1065 = vmatpush1.msra.mxu0 %v1033
    %1066 = vmatprep.subr.mxu0 0.0
    %1067 = vmatpush2.msra.mxu0 0.0
    %1068 = vmatprep.subr.mxu0 0.0
    %1069 = vmatpush2.msra.mxu0 0.0
    %1070 = vmatprep.subr.mxu0 0.0
    %1071 = vmatpush2.msra.mxu0 0.0
    %1072 = vmatprep.subr.mxu0 0.0
    %1073 = vmatpush2.msra.mxu0 0.0
    %1074 = vmatprep.subr.mxu0 0.0
    %1075 = vmatpush2.msra.mxu0 0.0
    %1076 = vmatprep.subr.mxu0 0.0
    %1077 = vmatpush2.msra.mxu0 0.0
    %1078 = vmatprep.subr.mxu0 0.0
    %1079 = vmatpush2.msra.mxu0 0.0
    %1080 = vmatprep.subr.mxu0 0.0
    %1081 = vmatpush2.msra.mxu0 0.0
    %1082 = vmatprep.subr.mxu0 0.0
    %1083 = vmatpush2.msra.mxu0 0.0
    %1084 = vmatprep.subr.mxu0 0.0
    %1085 = vmatpush2.msra.mxu0 0.0
    %1086 = vmatprep.subr.mxu0 0.0
    %1087 = vmatpush2.msra.mxu0 0.0
    %1088 = vmatprep.subr.mxu0 0.0
    %1089 = vmatpush2.msra.mxu0 0.0
    %1090 = vmatprep.subr.mxu0 0.0
    %1091 = vmatpush2.msra.mxu0 0.0
    %1092 = vmatprep.subr.mxu0 0.0
    %1093 = vmatpush2.msra.mxu0 0.0
    %1094 = vmatprep.subr.mxu0 0.0
    %1095 = vmatpush2.msra.mxu0 0.0
    %1096 = vmatprep.subr.mxu0 0.0
    %1097 = vmatpush2.msra.mxu0 0.0
    %1098 = vmatprep.mubr.f32.mxu0 0.0
    %1099 = vmatmul.mubr.f32.gmra.mxu0 %v770
    %v1100 = vpop.f32.mrf.mxu0
    %v1101 = vadd.f32 0.0, %v1100
    %v1102 = vpop.f32.mrf.mxu0
    %1103 = vdwg.mxu0
    %v1104 = vpack.c.bf16 %v1101, %v1101
    %1105 = vmatprep.subr.bf16.mxu0 0
    %1106 = vmatpush1.bf16.msra.mxu0 %v750
    %1107 = vmatprep.subr.bf16.mxu0 0
    %1108 = vmatpush1.bf16.msra.mxu0 %v749
    %1109 = vmatprep.subr.bf16.mxu0 0
    %1110 = vmatpush1.bf16.msra.mxu0 %v748
    %1111 = vmatprep.subr.bf16.mxu0 0
    %1112 = vmatpush1.bf16.msra.mxu0 %v747
    %1113 = vmatprep.subr.bf16.mxu0 0
    %1114 = vmatpush1.bf16.msra.mxu0 %v746
    %1115 = vmatprep.subr.bf16.mxu0 0
    %1116 = vmatpush1.bf16.msra.mxu0 %v745
    %1117 = vmatprep.subr.bf16.mxu0 0
    %1118 = vmatpush1.bf16.msra.mxu0 %v744
    %1119 = vmatprep.subr.bf16.mxu0 0
    %1120 = vmatpush1.bf16.msra.mxu0 %v743
    %1121 = vmatprep.subr.bf16.mxu0 0
    %1122 = vmatpush2.bf16.msra.mxu0 0
    %1123 = vmatprep.subr.bf16.mxu0 0
    %1124 = vmatpush2.bf16.msra.mxu0 0
    %1125 = vmatprep.subr.bf16.mxu0 0
    %1126 = vmatpush2.bf16.msra.mxu0 0
    %1127 = vmatprep.subr.bf16.mxu0 0
    %1128 = vmatpush2.bf16.msra.mxu0 0
    %1129 = vmatprep.subr.bf16.mxu0 0
    %1130 = vmatpush2.bf16.msra.mxu0 0
    %1131 = vmatprep.subr.bf16.mxu0 0
    %1132 = vmatpush2.bf16.msra.mxu0 0
    %1133 = vmatprep.subr.bf16.mxu0 0
    %1134 = vmatpush2.bf16.msra.mxu0 0
    %1135 = vmatprep.subr.bf16.mxu0 0
    %1136 = vmatpush2.bf16.msra.mxu0 0
    %1137 = vmatprep.mubr.bf16.mxu0 0
    %1138 = vmatmul.mubr.bf16.gmra.mxu0 %v1104
    %v1139 = vpop.f32.mrf.mxu0
    %v1140 = vadd.f32 0.0, %v1139
    %v1141 = vpop.f32.mrf.mxu0
    %v1142 = vpop.f32.mrf.mxu0
    %v1143 = vpop.f32.mrf.mxu0
    %1144 = vdwg.mxu0
    %v1145 = vmul.f32 %v1101, 1.5
    %v1146 = vsub.f32 %v1140, %v1145
    %v1147 = vsub.f32 %v113, %v1146
    %v1148 = vrot.slane %v1147, 4
    %v1149 = vmax.f32 %v1147, %v1148
    %v1150 = vrot.slane %v1149, 2
    %v1151 = vmax.f32 %v1149, %v1150
    %v1152 = vrot.slane %v1151, 1
    %v1153 = vmax.f32 %v1151, %v1152
    %v1154 = vsub.f32 %v1147, %v1153
    %v1155 = vmul.f32 %v1154, 1.442695
    %v1156 = vpow.pop %v1155
    %v1157 = vrot.slane %v1156, 4
    %v1158 = vadd.f32 %v1156, %v1157
    %v1159 = vrot.slane %v1158, 2
    %v1160 = vadd.f32 %v1158, %v1159
    %v1161 = vrot.slane %v1160, 1
    %v1162 = vadd.f32 %v1160, %v1161
    %v1163 = vrcp.pop %v1162
    %v1164 = vmul.f32 %v1156, %v1163
    %1165 = vmatprep.subr.mxu0 0.0
    %1166 = vmatpush1.msra.mxu0 0.0
    %1167 = vmatprep.subr.mxu0 0.0
    %1168 = vmatpush1.msra.mxu0 0.0
    %1169 = vmatprep.subr.mxu0 0.0
    %1170 = vmatpush1.msra.mxu0 0.0
    %1171 = vmatprep.subr.mxu0 0.0
    %1172 = vmatpush1.msra.mxu0 0.0
    %1173 = vmatprep.subr.mxu0 0.0
    %1174 = vmatpush1.msra.mxu0 0.0
    %1175 = vmatprep.subr.mxu0 0.0
    %1176 = vmatpush1.msra.mxu0 0.0
    %1177 = vmatprep.subr.mxu0 0.0
    %1178 = vmatpush1.msra.mxu0 0.0
    %1179 = vmatprep.subr.mxu0 0.0
    %1180 = vmatpush1.msra.mxu0 0.0
    %1181 = vmatprep.subr.mxu0 0.0
    %1182 = vmatpush1.msra.mxu0 0.0
    %1183 = vmatprep.subr.mxu0 0.0
    %1184 = vmatpush1.msra.mxu0 0.0
    %1185 = vmatprep.subr.mxu0 0.0
    %1186 = vmatpush1.msra.mxu0 0.0
    %1187 = vmatprep.subr.mxu0 0.0
    %1188 = vmatpush1.msra.mxu0 0.0
    %1189 = vmatprep.subr.mxu0 0.0
    %1190 = vmatpush1.msra.mxu0 0.0
    %1191 = vmatprep.subr.mxu0 0.0
    %1192 = vmatpush1.msra.mxu0 0.0
    %1193 = vmatprep.subr.mxu0 0.0
    %1194 = vmatpush1.msra.mxu0 0.0
    %1195 = vmatprep.subr.mxu0 0.0
    %1196 = vmatpush1.msra.mxu0 %v1164
    %1197 = vmatprep.subr.mxu0 0.0
    %1198 = vmatpush2.msra.mxu0 0.0
    %1199 = vmatprep.subr.mxu0 0.0
    %1200 = vmatpush2.msra.mxu0 0.0
    %1201 = vmatprep.subr.mxu0 0.0
    %1202 = vmatpush2.msra.mxu0 0.0
    %1203 = vmatprep.subr.mxu0 0.0
    %1204 = vmatpush2.msra.mxu0 0.0
    %1205 = vmatprep.subr.mxu0 0.0
    %1206 = vmatpush2.msra.mxu0 0.0
    %1207 = vmatprep.subr.mxu0 0.0
    %1208 = vmatpush2.msra.mxu0 0.0
    %1209 = vmatprep.subr.mxu0 0.0
    %1210 = vmatpush2.msra.mxu0 0.0
    %1211 = vmatprep.subr.mxu0 0.0
    %1212 = vmatpush2.msra.mxu0 0.0
    %1213 = vmatprep.subr.mxu0 0.0
    %1214 = vmatpush2.msra.mxu0 0.0
    %1215 = vmatprep.subr.mxu0 0.0
    %1216 = vmatpush2.msra.mxu0 0.0
    %1217 = vmatprep.subr.mxu0 0.0
    %1218 = vmatpush2.msra.mxu0 0.0
    %1219 = vmatprep.subr.mxu0 0.0
    %1220 = vmatpush2.msra.mxu0 0.0
    %1221 = vmatprep.subr.mxu0 0.0
    %1222 = vmatpush2.msra.mxu0 0.0
    %1223 = vmatprep.subr.mxu0 0.0
    %1224 = vmatpush2.msra.mxu0 0.0
    %1225 = vmatprep.subr.mxu0 0.0
    %1226 = vmatpush2.msra.mxu0 0.0
    %1227 = vmatprep.subr.mxu0 0.0
    %1228 = vmatpush2.msra.mxu0 0.0
    %1229 = vmatprep.mubr.f32.mxu0 0.0
    %1230 = vmatmul.mubr.f32.gmra.mxu0 %v770
    %v1231 = vpop.f32.mrf.mxu0
    %v1232 = vadd.f32 0.0, %v1231
    %v1233 = vpop.f32.mrf.mxu0
    %1234 = vdwg.mxu0
    %v1235 = vpack.c.bf16 %v1232, %v1232
    %1236 = vmatprep.subr.bf16.mxu0 0
    %1237 = vmatpush1.bf16.msra.mxu0 %v750
    %1238 = vmatprep.subr.bf16.mxu0 0
    %1239 = vmatpush1.bf16.msra.mxu0 %v749
    %1240 = vmatprep.subr.bf16.mxu0 0
    %1241 = vmatpush1.bf16.msra.mxu0 %v748
    %1242 = vmatprep.subr.bf16.mxu0 0
    %1243 = vmatpush1.bf16.msra.mxu0 %v747
    %1244 = vmatprep.subr.bf16.mxu0 0
    %1245 = vmatpush1.bf16.msra.mxu0 %v746
    %1246 = vmatprep.subr.bf16.mxu0 0
    %1247 = vmatpush1.bf16.msra.mxu0 %v745
    %1248 = vmatprep.subr.bf16.mxu0 0
    %1249 = vmatpush1.bf16.msra.mxu0 %v744
    %1250 = vmatprep.subr.bf16.mxu0 0
    %1251 = vmatpush1.bf16.msra.mxu0 %v743
    %1252 = vmatprep.subr.bf16.mxu0 0
    %1253 = vmatpush2.bf16.msra.mxu0 0
    %1254 = vmatprep.subr.bf16.mxu0 0
    %1255 = vmatpush2.bf16.msra.mxu0 0
    %1256 = vmatprep.subr.bf16.mxu0 0
    %1257 = vmatpush2.bf16.msra.mxu0 0
    %1258 = vmatprep.subr.bf16.mxu0 0
    %1259 = vmatpush2.bf16.msra.mxu0 0
    %1260 = vmatprep.subr.bf16.mxu0 0
    %1261 = vmatpush2.bf16.msra.mxu0 0
    %1262 = vmatprep.subr.bf16.mxu0 0
    %1263 = vmatpush2.bf16.msra.mxu0 0
    %1264 = vmatprep.subr.bf16.mxu0 0
    %1265 = vmatpush2.bf16.msra.mxu0 0
    %1266 = vmatprep.subr.bf16.mxu0 0
    %1267 = vmatpush2.bf16.msra.mxu0 0
    %1268 = vmatprep.mubr.bf16.mxu0 0
    %1269 = vmatmul.mubr.bf16.gmra.mxu0 %v1235
    %v1270 = vpop.f32.mrf.mxu0
    %v1271 = vadd.f32 0.0, %v1270
    %v1272 = vpop.f32.mrf.mxu0
    %v1273 = vpop.f32.mrf.mxu0
    %v1274 = vpop.f32.mrf.mxu0
    %1275 = vdwg.mxu0
    %v1276 = vmul.f32 %v1232, 1.5
    %v1277 = vsub.f32 %v1271, %v1276
    %v1278 = vsub.f32 %v113, %v1277
    %v1279 = vrot.slane %v1278, 4
    %v1280 = vmax.f32 %v1278, %v1279
    %v1281 = vrot.slane %v1280, 2
    %v1282 = vmax.f32 %v1280, %v1281
    %v1283 = vrot.slane %v1282, 1
    %v1284 = vmax.f32 %v1282, %v1283
    %v1285 = vsub.f32 %v1278, %v1284
    %v1286 = vmul.f32 %v1285, 1.442695
    %v1287 = vpow.pop %v1286
    %v1288 = vrot.slane %v1287, 4
    %v1289 = vadd.f32 %v1287, %v1288
    %v1290 = vrot.slane %v1289, 2
    %v1291 = vadd.f32 %v1289, %v1290
    %v1292 = vrot.slane %v1291, 1
    %v1293 = vadd.f32 %v1291, %v1292
    %v1294 = vrcp.pop %v1293
    %v1295 = vmul.f32 %v1287, %v1294
    %1296 = vmatprep.subr.mxu0 0.0
    %1297 = vmatpush1.msra.mxu0 0.0
    %1298 = vmatprep.subr.mxu0 0.0
    %1299 = vmatpush1.msra.mxu0 0.0
    %1300 = vmatprep.subr.mxu0 0.0
    %1301 = vmatpush1.msra.mxu0 0.0
    %1302 = vmatprep.subr.mxu0 0.0
    %1303 = vmatpush1.msra.mxu0 0.0
    %1304 = vmatprep.subr.mxu0 0.0
    %1305 = vmatpush1.msra.mxu0 0.0
    %1306 = vmatprep.subr.mxu0 0.0
    %1307 = vmatpush1.msra.mxu0 0.0
    %1308 = vmatprep.subr.mxu0 0.0
    %1309 = vmatpush1.msra.mxu0 0.0
    %1310 = vmatprep.subr.mxu0 0.0
    %1311 = vmatpush1.msra.mxu0 0.0
    %1312 = vmatprep.subr.mxu0 0.0
    %1313 = vmatpush1.msra.mxu0 0.0
    %1314 = vmatprep.subr.mxu0 0.0
    %1315 = vmatpush1.msra.mxu0 0.0
    %1316 = vmatprep.subr.mxu0 0.0
    %1317 = vmatpush1.msra.mxu0 0.0
    %1318 = vmatprep.subr.mxu0 0.0
    %1319 = vmatpush1.msra.mxu0 0.0
    %1320 = vmatprep.subr.mxu0 0.0
    %1321 = vmatpush1.msra.mxu0 0.0
    %1322 = vmatprep.subr.mxu0 0.0
    %1323 = vmatpush1.msra.mxu0 0.0
    %1324 = vmatprep.subr.mxu0 0.0
    %1325 = vmatpush1.msra.mxu0 0.0
    %1326 = vmatprep.subr.mxu0 0.0
    %1327 = vmatpush1.msra.mxu0 %v1295
    %1328 = vmatprep.subr.mxu0 0.0
    %1329 = vmatpush2.msra.mxu0 0.0
    %1330 = vmatprep.subr.mxu0 0.0
    %1331 = vmatpush2.msra.mxu0 0.0
    %1332 = vmatprep.subr.mxu0 0.0
    %1333 = vmatpush2.msra.mxu0 0.0
    %1334 = vmatprep.subr.mxu0 0.0
    %1335 = vmatpush2.msra.mxu0 0.0
    %1336 = vmatprep.subr.mxu0 0.0
    %1337 = vmatpush2.msra.mxu0 0.0
    %1338 = vmatprep.subr.mxu0 0.0
    %1339 = vmatpush2.msra.mxu0 0.0
    %1340 = vmatprep.subr.mxu0 0.0
    %1341 = vmatpush2.msra.mxu0 0.0
    %1342 = vmatprep.subr.mxu0 0.0
    %1343 = vmatpush2.msra.mxu0 0.0
    %1344 = vmatprep.subr.mxu0 0.0
    %1345 = vmatpush2.msra.mxu0 0.0
    %1346 = vmatprep.subr.mxu0 0.0
    %1347 = vmatpush2.msra.mxu0 0.0
    %1348 = vmatprep.subr.mxu0 0.0
    %1349 = vmatpush2.msra.mxu0 0.0
    %1350 = vmatprep.subr.mxu0 0.0
    %1351 = vmatpush2.msra.mxu0 0.0
    %1352 = vmatprep.subr.mxu0 0.0
    %1353 = vmatpush2.msra.mxu0 0.0
    %1354 = vmatprep.subr.mxu0 0.0
    %1355 = vmatpush2.msra.mxu0 0.0
    %1356 = vmatprep.subr.mxu0 0.0
    %1357 = vmatpush2.msra.mxu0 0.0
    %1358 = vmatprep.subr.mxu0 0.0
    %1359 = vmatpush2.msra.mxu0 0.0
    %1360 = vmatprep.mubr.f32.mxu0 0.0
    %1361 = vmatmul.mubr.f32.gmra.mxu0 %v770
    %v1362 = vpop.f32.mrf.mxu0
    %v1363 = vadd.f32 0.0, %v1362
    %v1364 = vpop.f32.mrf.mxu0
    %1365 = vdwg.mxu0
    %v1366 = vpack.c.bf16 %v1363, %v1363
    %1367 = vmatprep.subr.bf16.mxu0 0
    %1368 = vmatpush1.bf16.msra.mxu0 %v750
    %1369 = vmatprep.subr.bf16.mxu0 0
    %1370 = vmatpush1.bf16.msra.mxu0 %v749
    %1371 = vmatprep.subr.bf16.mxu0 0
    %1372 = vmatpush1.bf16.msra.mxu0 %v748
    %1373 = vmatprep.subr.bf16.mxu0 0
    %1374 = vmatpush1.bf16.msra.mxu0 %v747
    %1375 = vmatprep.subr.bf16.mxu0 0
    %1376 = vmatpush1.bf16.msra.mxu0 %v746
    %1377 = vmatprep.subr.bf16.mxu0 0
    %1378 = vmatpush1.bf16.msra.mxu0 %v745
    %1379 = vmatprep.subr.bf16.mxu0 0
    %1380 = vmatpush1.bf16.msra.mxu0 %v744
    %1381 = vmatprep.subr.bf16.mxu0 0
    %1382 = vmatpush1.bf16.msra.mxu0 %v743
    %1383 = vmatprep.subr.bf16.mxu0 0
    %1384 = vmatpush2.bf16.msra.mxu0 0
    %1385 = vmatprep.subr.bf16.mxu0 0
    %1386 = vmatpush2.bf16.msra.mxu0 0
    %1387 = vmatprep.subr.bf16.mxu0 0
    %1388 = vmatpush2.bf16.msra.mxu0 0
    %1389 = vmatprep.subr.bf16.mxu0 0
    %1390 = vmatpush2.bf16.msra.mxu0 0
    %1391 = vmatprep.subr.bf16.mxu0 0
    %1392 = vmatpush2.bf16.msra.mxu0 0
    %1393 = vmatprep.subr.bf16.mxu0 0
    %1394 = vmatpush2.bf16.msra.mxu0 0
    %1395 = vmatprep.subr.bf16.mxu0 0
    %1396 = vmatpush2.bf16.msra.mxu0 0
    %1397 = vmatprep.subr.bf16.mxu0 0
    %1398 = vmatpush2.bf16.msra.mxu0 0
    %1399 = vmatprep.mubr.bf16.mxu0 0
    %1400 = vmatmul.mubr.bf16.gmra.mxu0 %v1366
    %v1401 = vpop.f32.mrf.mxu0
    %v1402 = vadd.f32 0.0, %v1401
    %v1403 = vpop.f32.mrf.mxu0
    %v1404 = vpop.f32.mrf.mxu0
    %v1405 = vpop.f32.mrf.mxu0
    %1406 = vdwg.mxu0
    %v1407 = vmul.f32 %v1363, 1.5
    %v1408 = vsub.f32 %v1402, %v1407
    %v1409 = vsub.f32 %v113, %v1408
    %1410 = vst [vmem:[#allocation2] sm:$0xff] %v1409
    // Predicated region
    $region34: #{wrapper_forward.1} parent=1 // pred_check
      _
    $region35: #{wrapper_forward.1} parent=1 // pred_check_branch
      %1412 = sbr.rel (0) target = $region37
    $region36: #{wrapper_forward.1} parent=1 // pred_region
      %s1414 = ssub.s32 128, 128
      %1415 = vsyncadd [#allocation3], %s1414
      %s1417 = sshll.u32 [#allocation2], 4
      %s1418 = int_to_ptr.vmem [resolvable:$true] %s1417
      %1420 = dma.vmem_to_hbm [thread:$0]  %s1418, 128, %s8, [#allocation3]
    $region37: #{wrapper_forward.1} parent=1 // pred_fallthru
      _
    // Predicated region
    $region38: #{wrapper_forward.1} parent=1 // pred_check
      _
    $region39: #{wrapper_forward.1} parent=1 // pred_check_branch
      %1422 = sbr.rel (0) target = $region41
    $region40: #{wrapper_forward.1} parent=1 // pred_region
      %1423 = dma.done [#allocation3], 128
    $region41: #{wrapper_forward.1} parent=1 // pred_fallthru
      _
    %1424 = vsyncpa [#allocation3], 1

</llo_original>
